<compile_context>
chip_gen: v7x
topology: tpu7x:2x2x1
jax: 0.10.0
libtpu: 0.0.40
codegen_flags: <defaults>
</compile_context>

<pallas_src>
import functools

import jax
import jax.numpy as jnp
from jax.experimental import pallas as pl
from jax.experimental.pallas import tpu as pltpu

_LANE = 128


def _round_up(x, m):
    return ((x + m - 1) // m) * m


def _pick_tile(n_pad, candidates):
    """Largest candidate that evenly divides n_pad (n_pad is a multiple of 128)."""
    for t in candidates:
        if t <= n_pad and n_pad % t == 0:
            return t
    return _LANE


def _pad2d(a, rows, cols):
    return jnp.zeros((rows, cols), jnp.float32).at[:a.shape[0], :a.shape[1]].set(a)


def _gcn_layer_kernel(adj_ref, x_ref, w_ref, b_ref, o_ref, acc_ref, *, apply_relu):
    """One GCN layer grid step.

    Grid = (row_tiles, k_tiles).  Per step: acc += A_norm_tile @ x_tile.
    On the last K step: out = acc @ W + b (+ ReLU).
    """
    k = pl.program_id(1)

    @pl.when(k == 0)
    def _init():
        acc_ref[...] = jnp.zeros_like(acc_ref)

    # Aggregation: reduce over source-node tiles (K axis, last grid dim).
    acc_ref[...] += jnp.dot(adj_ref[...], x_ref[...],
                            preferred_element_type=jnp.float32)

    # Projection + bias + activation once per output row tile (finalize only).
    @pl.when(k == pl.num_programs(1) - 1)
    def _finalize():
        h = jnp.dot(acc_ref[...], w_ref[...],
                    preferred_element_type=jnp.float32)
        h = h + b_ref[...]
        if apply_relu:
            h = jnp.maximum(h, 0.0)
        o_ref[...] = h.astype(o_ref.dtype)


def gcn_layer(adj_n, x, w, b, *, apply_relu):
    """adj_n: (Np, Np) pre-normalized adjacency; x: (Np, Fin_p);
    w: (Fin_p, Fout_p); b: (1, Fout_p).  All padded to lane multiples."""
    n_pad = adj_n.shape[0]
    f_in = x.shape[1]
    f_out = w.shape[1]

    tm = _pick_tile(n_pad, (512, 384, 256, 128))   # output row tile
    tk = _pick_tile(n_pad, (512, 384, 256, 128))   # reduction (source node) tile
    grid = (n_pad // tm, n_pad // tk)

    kernel = functools.partial(_gcn_layer_kernel, apply_relu=apply_relu)

    cost = pl.CostEstimate(
        flops=2 * n_pad * n_pad * f_in + 2 * n_pad * f_in * f_out,
        transcendentals=0,
        bytes_accessed=4 * (n_pad * n_pad + n_pad * f_in
                            + f_in * f_out + n_pad * f_out),
    )

    return pl.pallas_call(
        kernel,
        out_shape=jax.ShapeDtypeStruct((n_pad, f_out), jnp.float32),
        grid_spec=pltpu.PrefetchScalarGridSpec(
            num_scalar_prefetch=0,
            grid=grid,
            in_specs=[
                pl.BlockSpec((tm, tk), lambda i, k: (i, k)),        # A_norm tile
                pl.BlockSpec((tk, f_in), lambda i, k: (k, 0)),      # src features
                pl.BlockSpec((f_in, f_out), lambda i, k: (0, 0)),   # weight (full, resident)
                pl.BlockSpec((1, f_out), lambda i, k: (0, 0)),      # bias (resident)
            ],
            out_specs=pl.BlockSpec((tm, f_out), lambda i, k: (i, 0)),
            scratch_shapes=[pltpu.VMEM((tm, f_in), jnp.float32)],
        ),
        compiler_params=pltpu.CompilerParams(
            dimension_semantics=("parallel", "arbitrary"),
            vmem_limit_bytes=64 * 1024 * 1024,
        ),
        cost_estimate=cost,
    )(adj_n, x, w, b)


def xavier_uniform(key, fan_in, fan_out):
    bound = jnp.sqrt(6.0 / (fan_in + fan_out))
    return jax.random.uniform(key, (fan_in, fan_out), jnp.float32,
                              minval=-bound, maxval=bound)


def gcn_featdrop_forward(adj, features, params):
    """Full GCN_featdrop forward (2 GCN layers, dropout as identity/eval)."""
    adj = adj.astype(jnp.float32)
    n = adj.shape[0]
    w1, b1, w2, b2 = params
    in_size, hid_size = w1.shape
    out_size = w2.shape[1]

    # dropout(0.5): identity in eval mode.
    h0 = features.astype(jnp.float32)

    # norm='both': fold both degree normalizations into the adjacency once;
    # both layers reuse the same A_norm.
    out_deg = jnp.clip(adj.sum(axis=0), 1.0)   # source (out) degrees
    in_deg = jnp.clip(adj.sum(axis=1), 1.0)    # destination (in) degrees
    adj_n = (in_deg ** -0.5)[:, None] * adj * (out_deg ** -0.5)[None, :]

    # Pad nodes and every feature dim to lane-dense multiples of 128.
    n_pad = _round_up(n, _LANE)
    in_p = _round_up(in_size, _LANE)
    hid_p = _round_up(hid_size, _LANE)
    out_p = _round_up(out_size, _LANE)

    adj_p = _pad2d(adj_n, n_pad, n_pad)
    x_p = _pad2d(h0, n_pad, in_p)
    w1_p = _pad2d(w1, in_p, hid_p)
    w2_p = _pad2d(w2, hid_p, out_p)
    b1_p = _pad2d(b1.reshape(1, -1), 1, hid_p)
    b2_p = _pad2d(b2.reshape(1, -1), 1, out_p)

    # layer 1 (ReLU), layer 2 (linear).  Padded rows/cols stay zero-consistent.
    h = gcn_layer(adj_p, x_p, w1_p, b1_p, apply_relu=True)    # (n_pad, hid_p)
    y = gcn_layer(adj_p, h, w2_p, b2_p, apply_relu=False)     # (n_pad, out_p)
    return y[:n, :out_size]


if __name__ == "__main__":
    key = jax.random.PRNGKey(0)
    k_adj, k_feat, k_w1, k_w2 = jax.random.split(key, 4)

    # small synthetic graph / features (exercises a multi-tile grid: 384 = 3*128 padded)
    N, IN_SIZE, HID_SIZE, OUT_SIZE = 300, 16, 32, 8

    # random directed adjacency + self-loops (guarantees no 0-in-degree nodes)
    rand_adj = (jax.random.uniform(k_adj, (N, N)) < 0.05).astype(jnp.float32)
    adj = jnp.clip(rand_adj + jnp.eye(N, dtype=jnp.float32), 0.0, 1.0)

    features = jax.random.normal(k_feat, (N, IN_SIZE), jnp.float32)

    # deterministic parameter init (matches module __init__ shapes)
    w1 = xavier_uniform(k_w1, IN_SIZE, HID_SIZE)
    b1 = jnp.zeros((HID_SIZE,), jnp.float32)
    w2 = xavier_uniform(k_w2, HID_SIZE, OUT_SIZE)
    b2 = jnp.zeros((OUT_SIZE,), jnp.float32)
    params = (w1, b1, w2, b2)

    out = gcn_featdrop_forward(adj, features, params)
    jax.block_until_ready(out)

    # pure-JAX reference of the exact DGL GCNLayer math (norm='both')
    d_out = (jnp.clip(adj.sum(0), 1.0) ** -0.5)[:, None]
    d_in = (jnp.clip(adj.sum(1), 1.0) ** -0.5)[:, None]
    h_ref = jnp.maximum(d_in * (adj @ (d_out * features)) @ w1 + b1, 0.0)
    y_ref = d_in * (adj @ ((d_out * h_ref) @ w2)) + b2

    assert out.shape == (N, OUT_SIZE)
    assert jnp.allclose(out, y_ref, atol=1e-3, rtol=1e-3), float(
        jnp.max(jnp.abs(out - y_ref)))

    print("KERNEL_OK")
</pallas_src>

<mosaic_0001>
module attributes {stable_mosaic.version = 11 : i64} {
  func.func @_gcn_layer_kernel(%arg0: i32, %arg1: i32, %arg2: memref<384x384xf32, #tpu.memory_space<vmem>>, %arg3: memref<384x128xf32, #tpu.memory_space<vmem>>, %arg4: memref<128x128xf32, #tpu.memory_space<vmem>>, %arg5: memref<1x128xf32, #tpu.memory_space<vmem>>, %arg6: memref<384x128xf32, #tpu.memory_space<vmem>>, %arg7: memref<384x128xf32, #tpu.memory_space<vmem>>) attributes {dimension_semantics = [#tpu.dimension_semantics<parallel>, #tpu.dimension_semantics<arbitrary>], iteration_bounds = array<i64: 1, 1>, scalar_prefetch = 0 : i64, scratch_operands = 1 : i64, tpu.core_type = #tpu.core_type<tc>, window_params = [{transform_indices = @transform_0, window_bounds = array<i64: 384, 384>}, {transform_indices = @transform_1, window_bounds = array<i64: 384, 128>}, {pipeline_mode = #tpu.pipeline_mode<synchronous>, transform_indices = @transform_2, window_bounds = array<i64: 128, 128>}, {pipeline_mode = #tpu.pipeline_mode<synchronous>, transform_indices = @transform_3, window_bounds = array<i64: 1, 128>}, {transform_indices = @transform_4, window_bounds = array<i64: 384, 128>}]} {
    %c0_i32 = arith.constant 0 : i32
    %0 = arith.cmpi eq, %arg1, %c0_i32 : i32
    %1 = arith.extui %0 : i1 to i32
    %c0_i32_0 = arith.constant 0 : i32
    %2 = arith.cmpi ne, %1, %c0_i32_0 : i32
    scf.if %2 {
      %cst_10 = arith.constant 0.000000e+00 : f32
      %12 = vector.broadcast %cst_10 : f32 to vector<384x128xf32>
      %c0_11 = arith.constant 0 : index
      %c0_12 = arith.constant 0 : index
      %13 = vector.load %arg7[%c0_11, %c0_12] : memref<384x128xf32, #tpu.memory_space<vmem>>, vector<384x128xf32>
      tpu.vector_store %arg7[%c0_11, %c0_12], %12 {strides = array<i32>} : memref<384x128xf32, #tpu.memory_space<vmem>>, vector<384x128xf32>,
    } else {
    }
    %c0 = arith.constant 0 : index
    %c0_1 = arith.constant 0 : index
    %3 = vector.load %arg7[%c0, %c0_1] : memref<384x128xf32, #tpu.memory_space<vmem>>, vector<384x128xf32>
    %c0_2 = arith.constant 0 : index
    %c0_3 = arith.constant 0 : index
    %4 = vector.load %arg2[%c0_2, %c0_3] : memref<384x384xf32, #tpu.memory_space<vmem>>, vector<384x384xf32>
    %c0_4 = arith.constant 0 : index
    %c0_5 = arith.constant 0 : index
    %5 = vector.load %arg3[%c0_4, %c0_5] : memref<384x128xf32, #tpu.memory_space<vmem>>, vector<384x128xf32>
    %cst = arith.constant dense<0.000000e+00> : vector<384x128xf32>
    %6 = tpu.matmul %4, %5, %cst {dimension_numbers = #tpu.dot_dimension_numbers<[1], [0], [0], [1], [0, 0, 1, 1], [], []>} : vector<384x384xf32>, vector<384x128xf32>, vector<384x128xf32> -> vector<384x128xf32>
    %7 = arith.addf %3, %6 : vector<384x128xf32>
    %c0_6 = arith.constant 0 : index
    %c0_7 = arith.constant 0 : index
    %8 = vector.load %arg7[%c0_6, %c0_7] : memref<384x128xf32, #tpu.memory_space<vmem>>, vector<384x128xf32>
    tpu.vector_store %arg7[%c0_6, %c0_7], %7 {strides = array<i32>} : memref<384x128xf32, #tpu.memory_space<vmem>>, vector<384x128xf32>,
    %c0_i32_8 = arith.constant 0 : i32
    %9 = arith.cmpi eq, %arg1, %c0_i32_8 : i32
    %10 = arith.extui %9 : i1 to i32
    %c0_i32_9 = arith.constant 0 : i32
    %11 = arith.cmpi ne, %10, %c0_i32_9 : i32
    scf.if %11 {
      %c0_10 = arith.constant 0 : index
      %c0_11 = arith.constant 0 : index
      %12 = vector.load %arg7[%c0_10, %c0_11] : memref<384x128xf32, #tpu.memory_space<vmem>>, vector<384x128xf32>
      %c0_12 = arith.constant 0 : index
      %c0_13 = arith.constant 0 : index
      %13 = vector.load %arg4[%c0_12, %c0_13] : memref<128x128xf32, #tpu.memory_space<vmem>>, vector<128x128xf32>
      %cst_14 = arith.constant dense<0.000000e+00> : vector<384x128xf32>
      %14 = tpu.matmul %12, %13, %cst_14 {dimension_numbers = #tpu.dot_dimension_numbers<[1], [0], [0], [1], [0, 0, 1, 1], [], []>} : vector<384x128xf32>, vector<128x128xf32>, vector<384x128xf32> -> vector<384x128xf32>
      %c0_15 = arith.constant 0 : index
      %c0_16 = arith.constant 0 : index
      %15 = vector.load %arg5[%c0_15, %c0_16] : memref<1x128xf32, #tpu.memory_space<vmem>>, vector<1x128xf32>
      %16 = vector.broadcast %15 : vector<1x128xf32> to vector<384x128xf32>
      %17 = arith.addf %14, %16 : vector<384x128xf32>
      %cst_17 = arith.constant 0.000000e+00 : f32
      %18 = vector.broadcast %cst_17 : f32 to vector<384x128xf32>
      %19 = arith.maximumf %17, %18 : vector<384x128xf32>
      %c0_18 = arith.constant 0 : index
      %c0_19 = arith.constant 0 : index
      %20 = vector.load %arg6[%c0_18, %c0_19] : memref<384x128xf32, #tpu.memory_space<vmem>>, vector<384x128xf32>
      tpu.vector_store %arg6[%c0_18, %c0_19], %19 {strides = array<i32>} : memref<384x128xf32, #tpu.memory_space<vmem>>, vector<384x128xf32>,
    } else {
    }
    return
  }
  func.func @transform_0(%arg0: i32, %arg1: i32) -> (i32, i32) {
    %c0_i32 = arith.constant 0 : i32
    return %arg0, %arg1 : i32, i32
  }
  func.func @transform_1(%arg0: i32, %arg1: i32) -> (i32, i32) {
    %c0_i32 = arith.constant 0 : i32
    %c0_i32_0 = arith.constant 0 : i32
    return %arg1, %c0_i32 : i32, i32
  }
  func.func @transform_2(%arg0: i32, %arg1: i32) -> (i32, i32) {
    %c0_i32 = arith.constant 0 : i32
    %c0_i32_0 = arith.constant 0 : i32
    %c0_i32_1 = arith.constant 0 : i32
    return %c0_i32, %c0_i32_0 : i32, i32
  }
  func.func @transform_3(%arg0: i32, %arg1: i32) -> (i32, i32) {
    %c0_i32 = arith.constant 0 : i32
    %c0_i32_0 = arith.constant 0 : i32
    %c0_i32_1 = arith.constant 0 : i32
    return %c0_i32, %c0_i32_0 : i32, i32
  }
  func.func @transform_4(%arg0: i32, %arg1: i32) -> (i32, i32) {
    %c0_i32 = arith.constant 0 : i32
    %c0_i32_0 = arith.constant 0 : i32
    return %arg0, %c0_i32 : i32, i32
  }
}

</mosaic_0001>

<llo_original>
// kernel: tpu_custom_call.1
$region0: #{tpu_custom_call.1}
  #allocation0 [shape = 'u32[]', space=smem, size = 0x4, offset = 0x4, fixed_abs, tag = 'smem constant byte address 0x4 - core index']
  #allocation1 [shape = 'u32[144,128]{1,0:T(1,128)}', space=vmem, size = 0x12000, scoped, tag = 'internal scratch']
  #allocation2 [shape = 'f32[384,128]{1,0:T(8,128)}', space=vmem, size = 0x30000, scoped, tag = 'scratch operand']
  %s0 = inlined_call_operand.hbm [shape: f32[384,384], index: 0, kind: input, shape index: {}]
  %s1 = inlined_call_operand.hbm [shape: f32[384,128], index: 1, kind: input, shape index: {}]
  %s2 = inlined_call_operand.hbm [shape: f32[128,128], index: 2, kind: input, shape index: {}]
  %s3 = inlined_call_operand.hbm [shape: f32[1,128], index: 3, kind: input, shape index: {}]
  %s4 = inlined_call_operand.hbm [shape: f32[384,128], index: 4, kind: output, shape index: {}]
  %s5 = sld [smem:[#allocation0]]
  $region50: #{tpu_custom_call.1} parent=0
    _
  %s7 = ssub.s32 1, %s5
  %s8 = scalar_select 0, %s7, %s5
  $region1: #{tpu_custom_call.1} parent=0
    #allocation3 [shape = 'u8[589824]{0}', space=vmem, size = 0x90000, scoped, tag = 'input window, operand 0, single buffered']
    #allocation4 [shape = 's32[1]{0}', space=sflag, size = 0x4, scoped, tag = 'scoped memory for tpu_custom_call.1']
    #allocation5 [shape = 's32[1]{0}', space=sflag, size = 0x4, scoped, tag = 'scoped memory for tpu_custom_call.1']
    #allocation6 [shape = 'u8[196608]{0}', space=vmem, size = 0x30000, scoped, tag = 'input window, operand 1, single buffered']
    #allocation7 [shape = 's32[1]{0}', space=sflag, size = 0x4, scoped, tag = 'scoped memory for tpu_custom_call.1']
    #allocation8 [shape = 'u8[65536]{0}', space=vmem, size = 0x10000, scoped, tag = 'input window, operand 2, single buffered']
    #allocation9 [shape = 'u8[512]{0}', space=vmem, size = 0x400, scoped, tag = 'input window, operand 3, single buffered']
    #allocation10 [shape = 's32[1]{0}', space=sflag, size = 0x4, scoped, tag = 'scoped memory for tpu_custom_call.1']
    #allocation11 [shape = 'u8[196608]{0}', space=vmem, size = 0x30000, scoped, tag = 'output window, operand 0, single buffered']
    %9 = vsyncpa [#allocation4], 0
    %10 = vsyncpa [#allocation7], 0
    %11 = vsyncpa [#allocation10], 0
    %12 = vsyncpa [#allocation5], 0
    // Predicated region
    $region2: #{tpu_custom_call.1} parent=1 // pred_check
      _
    $region3: #{tpu_custom_call.1} parent=1 // pred_check_branch
      %14 = sbr.rel (0) target = $region5
    $region4: #{tpu_custom_call.1} parent=1 // pred_region
      %s16 = ssub.s32 18432, 18432
      %17 = vsyncadd [#allocation4], %s16
      %s18 = sshll.u32 [#allocation3], 4
      %s19 = int_to_ptr.vmem [resolvable:$true] %s18
      %24 = dma.hbm_to_vmem [thread:$0]  %s0, 18432, %s19, [#allocation4], 384, 384, 24
    $region5: #{tpu_custom_call.1} parent=1 // pred_fallthru
      _
    // Predicated region
    $region6: #{tpu_custom_call.1} parent=1 // pred_check
      _
    $region7: #{tpu_custom_call.1} parent=1 // pred_check_branch
      %26 = sbr.rel (0) target = $region9
    $region8: #{tpu_custom_call.1} parent=1 // pred_region
      %s28 = ssub.s32 6144, 6144
      %29 = vsyncadd [#allocation7], %s28
      %s30 = sshll.u32 [#allocation6], 4
      %s31 = int_to_ptr.vmem [resolvable:$true] %s30
      %36 = dma.hbm_to_vmem [thread:$0]  %s1, 6144, %s31, [#allocation7], 128, 128, 8
    $region9: #{tpu_custom_call.1} parent=1 // pred_fallthru
      _
    // Predicated region
    $region10: #{tpu_custom_call.1} parent=1 // pred_check
      _
    $region11: #{tpu_custom_call.1} parent=1 // pred_check_branch
      %38 = sbr.rel (0) target = $region13
    $region12: #{tpu_custom_call.1} parent=1 // pred_region
      %s40 = ssub.s32 2048, 2048
      %41 = vsyncadd [#allocation7], %s40
      %s42 = sshll.u32 [#allocation8], 4
      %s43 = int_to_ptr.vmem [resolvable:$true] %s42
      %48 = dma.hbm_to_vmem [thread:$0]  %s2, 2048, %s43, [#allocation7], 128, 128, 8
    $region13: #{tpu_custom_call.1} parent=1 // pred_fallthru
      _
    // Predicated region
    $region14: #{tpu_custom_call.1} parent=1 // pred_check
      _
    $region15: #{tpu_custom_call.1} parent=1 // pred_check_branch
      %50 = sbr.rel (0) target = $region17
    $region16: #{tpu_custom_call.1} parent=1 // pred_region
      %s52 = ssub.s32 16, 16
      %53 = vsyncadd [#allocation10], %s52
      %s55 = sshll.u32 [#allocation9], 4
      %s56 = int_to_ptr.vmem [resolvable:$true] %s55
      %58 = dma.hbm_to_vmem [thread:$0]  %s3, 16, %s56, [#allocation10]
    $region17: #{tpu_custom_call.1} parent=1 // pred_fallthru
      _
    // Predicated region
    $region18: #{tpu_custom_call.1} parent=1 // pred_check
      _
    $region19: #{tpu_custom_call.1} parent=1 // pred_check_branch
      %60 = sbr.rel (0) target = $region21
    $region20: #{tpu_custom_call.1} parent=1 // pred_region
      %61 = dma.done [#allocation4], 18432
    $region21: #{tpu_custom_call.1} parent=1 // pred_fallthru
      _
    // Predicated region
    $region22: #{tpu_custom_call.1} parent=1 // pred_check
      _
    $region23: #{tpu_custom_call.1} parent=1 // pred_check_branch
      %63 = sbr.rel (0) target = $region25
    $region24: #{tpu_custom_call.1} parent=1 // pred_region
      %64 = dma.done [#allocation7], 6144
    $region25: #{tpu_custom_call.1} parent=1 // pred_fallthru
      _
    // Predicated region
    $region26: #{tpu_custom_call.1} parent=1 // pred_check
      _
    $region27: #{tpu_custom_call.1} parent=1 // pred_check_branch
      %66 = sbr.rel (0) target = $region29
    $region28: #{tpu_custom_call.1} parent=1 // pred_region
      %67 = dma.done [#allocation7], 2048
    $region29: #{tpu_custom_call.1} parent=1 // pred_fallthru
      _
    // Predicated region
    $region30: #{tpu_custom_call.1} parent=1 // pred_check
      _
    $region31: #{tpu_custom_call.1} parent=1 // pred_check_branch
      %69 = sbr.rel (0) target = $region33
    $region32: #{tpu_custom_call.1} parent=1 // pred_region
      %70 = dma.done [#allocation10], 16
    $region33: #{tpu_custom_call.1} parent=1 // pred_fallthru
      _
    %p71 = scmp.eq.s32.totalorder 0, 0
    // Predicated region
    $region34: #{tpu_custom_call.1} parent=1 // pred_check
      %p72 = pneg %p71
    $region35: #{tpu_custom_call.1} parent=1 // pred_check_branch
      %74 = sbr.rel (%p72) target = $region37
    $region36: #{tpu_custom_call.1} parent=1 // pred_region
      %75 = vst [vmem:[#allocation2] sm:$0xff] 0.0
      %76 = vst [vmem:[#allocation2 + $0x8] sm:$0xff] 0.0
      %77 = vst [vmem:[#allocation2 + $0x10] sm:$0xff] 0.0
      %78 = vst [vmem:[#allocation2 + $0x18] sm:$0xff] 0.0
      %79 = vst [vmem:[#allocation2 + $0x20] sm:$0xff] 0.0
      %80 = vst [vmem:[#allocation2 + $0x28] sm:$0xff] 0.0
      %81 = vst [vmem:[#allocation2 + $0x30] sm:$0xff] 0.0
      %82 = vst [vmem:[#allocation2 + $0x38] sm:$0xff] 0.0
      %83 = vst [vmem:[#allocation2 + $0x40] sm:$0xff] 0.0
      %84 = vst [vmem:[#allocation2 + $0x48] sm:$0xff] 0.0
      %85 = vst [vmem:[#allocation2 + $0x50] sm:$0xff] 0.0
      %86 = vst [vmem:[#allocation2 + $0x58] sm:$0xff] 0.0
      %87 = vst [vmem:[#allocation2 + $0x60] sm:$0xff] 0.0
      %88 = vst [vmem:[#allocation2 + $0x68] sm:$0xff] 0.0
      %89 = vst [vmem:[#allocation2 + $0x70] sm:$0xff] 0.0
      %90 = vst [vmem:[#allocation2 + $0x78] sm:$0xff] 0.0
      %91 = vst [vmem:[#allocation2 + $0x80] sm:$0xff] 0.0
      %92 = vst [vmem:[#allocation2 + $0x88] sm:$0xff] 0.0
      %93 = vst [vmem:[#allocation2 + $0x90] sm:$0xff] 0.0
      %94 = vst [vmem:[#allocation2 + $0x98] sm:$0xff] 0.0
      %95 = vst [vmem:[#allocation2 + $0xa0] sm:$0xff] 0.0
      %96 = vst [vmem:[#allocation2 + $0xa8] sm:$0xff] 0.0
      %97 = vst [vmem:[#allocation2 + $0xb0] sm:$0xff] 0.0
      %98 = vst [vmem:[#allocation2 + $0xb8] sm:$0xff] 0.0
      %99 = vst [vmem:[#allocation2 + $0xc0] sm:$0xff] 0.0
      %100 = vst [vmem:[#allocation2 + $0xc8] sm:$0xff] 0.0
      %101 = vst [vmem:[#allocation2 + $0xd0] sm:$0xff] 0.0
      %102 = vst [vmem:[#allocation2 + $0xd8] sm:$0xff] 0.0
      %103 = vst [vmem:[#allocation2 + $0xe0] sm:$0xff] 0.0
      %104 = vst [vmem:[#allocation2 + $0xe8] sm:$0xff] 0.0
      %105 = vst [vmem:[#allocation2 + $0xf0] sm:$0xff] 0.0
      %106 = vst [vmem:[#allocation2 + $0xf8] sm:$0xff] 0.0
      %107 = vst [vmem:[#allocation2 + $0x100] sm:$0xff] 0.0
      %108 = vst [vmem:[#allocation2 + $0x108] sm:$0xff] 0.0
      %109 = vst [vmem:[#allocation2 + $0x110] sm:$0xff] 0.0
      %110 = vst [vmem:[#allocation2 + $0x118] sm:$0xff] 0.0
      %111 = vst [vmem:[#allocation2 + $0x120] sm:$0xff] 0.0
      %112 = vst [vmem:[#allocation2 + $0x128] sm:$0xff] 0.0
      %113 = vst [vmem:[#allocation2 + $0x130] sm:$0xff] 0.0
      %114 = vst [vmem:[#allocation2 + $0x138] sm:$0xff] 0.0
      %115 = vst [vmem:[#allocation2 + $0x140] sm:$0xff] 0.0
      %116 = vst [vmem:[#allocation2 + $0x148] sm:$0xff] 0.0
      %117 = vst [vmem:[#allocation2 + $0x150] sm:$0xff] 0.0
      %118 = vst [vmem:[#allocation2 + $0x158] sm:$0xff] 0.0
      %119 = vst [vmem:[#allocation2 + $0x160] sm:$0xff] 0.0
      %120 = vst [vmem:[#allocation2 + $0x168] sm:$0xff] 0.0
      %121 = vst [vmem:[#allocation2 + $0x170] sm:$0xff] 0.0
      %122 = vst [vmem:[#allocation2 + $0x178] sm:$0xff] 0.0
    $region37: #{tpu_custom_call.1} parent=1 // pred_fallthru
      _
    %v123 = vld [vmem:[#allocation2] sm:$0xff]
    %v124 = vld [vmem:[#allocation2 + $0x8] sm:$0xff]
    %v125 = vld [vmem:[#allocation2 + $0x10] sm:$0xff]
    %v126 = vld [vmem:[#allocation2 + $0x18] sm:$0xff]
    %v127 = vld [vmem:[#allocation2 + $0x20] sm:$0xff]
    %v128 = vld [vmem:[#allocation2 + $0x28] sm:$0xff]
    %v129 = vld [vmem:[#allocation2 + $0x30] sm:$0xff]
    %v130 = vld [vmem:[#allocation2 + $0x38] sm:$0xff]
    %v131 = vld [vmem:[#allocation2 + $0x40] sm:$0xff]
    %v132 = vld [vmem:[#allocation2 + $0x48] sm:$0xff]
    %v133 = vld [vmem:[#allocation2 + $0x50] sm:$0xff]
    %v134 = vld [vmem:[#allocation2 + $0x58] sm:$0xff]
    %v135 = vld [vmem:[#allocation2 + $0x60] sm:$0xff]
    %v136 = vld [vmem:[#allocation2 + $0x68] sm:$0xff]
    %v137 = vld [vmem:[#allocation2 + $0x70] sm:$0xff]
    %v138 = vld [vmem:[#allocation2 + $0x78] sm:$0xff]
    %v139 = vld [vmem:[#allocation2 + $0x80] sm:$0xff]
    %v140 = vld [vmem:[#allocation2 + $0x88] sm:$0xff]
    %v141 = vld [vmem:[#allocation2 + $0x90] sm:$0xff]
    %v142 = vld [vmem:[#allocation2 + $0x98] sm:$0xff]
    %v143 = vld [vmem:[#allocation2 + $0xa0] sm:$0xff]
    %v144 = vld [vmem:[#allocation2 + $0xa8] sm:$0xff]
    %v145 = vld [vmem:[#allocation2 + $0xb0] sm:$0xff]
    %v146 = vld [vmem:[#allocation2 + $0xb8] sm:$0xff]
    %v147 = vld [vmem:[#allocation2 + $0xc0] sm:$0xff]
    %v148 = vld [vmem:[#allocation2 + $0xc8] sm:$0xff]
    %v149 = vld [vmem:[#allocation2 + $0xd0] sm:$0xff]
    %v150 = vld [vmem:[#allocation2 + $0xd8] sm:$0xff]
    %v151 = vld [vmem:[#allocation2 + $0xe0] sm:$0xff]
    %v152 = vld [vmem:[#allocation2 + $0xe8] sm:$0xff]
    %v153 = vld [vmem:[#allocation2 + $0xf0] sm:$0xff]
    %v154 = vld [vmem:[#allocation2 + $0xf8] sm:$0xff]
    %v155 = vld [vmem:[#allocation2 + $0x100] sm:$0xff]
    %v156 = vld [vmem:[#allocation2 + $0x108] sm:$0xff]
    %v157 = vld [vmem:[#allocation2 + $0x110] sm:$0xff]
    %v158 = vld [vmem:[#allocation2 + $0x118] sm:$0xff]
    %v159 = vld [vmem:[#allocation2 + $0x120] sm:$0xff]
    %v160 = vld [vmem:[#allocation2 + $0x128] sm:$0xff]
    %v161 = vld [vmem:[#allocation2 + $0x130] sm:$0xff]
    %v162 = vld [vmem:[#allocation2 + $0x138] sm:$0xff]
    %v163 = vld [vmem:[#allocation2 + $0x140] sm:$0xff]
    %v164 = vld [vmem:[#allocation2 + $0x148] sm:$0xff]
    %v165 = vld [vmem:[#allocation2 + $0x150] sm:$0xff]
    %v166 = vld [vmem:[#allocation2 + $0x158] sm:$0xff]
    %v167 = vld [vmem:[#allocation2 + $0x160] sm:$0xff]
    %v168 = vld [vmem:[#allocation2 + $0x168] sm:$0xff]
    %v169 = vld [vmem:[#allocation2 + $0x170] sm:$0xff]
    %v170 = vld [vmem:[#allocation2 + $0x178] sm:$0xff]
    %v171 = vld [vmem:[#allocation3] sm:$0xff]
    %v172 = vld [vmem:[#allocation3 + $0x8] sm:$0xff]
    %v173 = vld [vmem:[#allocation3 + $0x10] sm:$0xff]
    %v174 = vld [vmem:[#allocation3 + $0x18] sm:$0xff]
    %v175 = vld [vmem:[#allocation3 + $0x20] sm:$0xff]
    %v176 = vld [vmem:[#allocation3 + $0x28] sm:$0xff]
    %v177 = vld [vmem:[#allocation3 + $0x30] sm:$0xff]
    %v178 = vld [vmem:[#allocation3 + $0x38] sm:$0xff]
    %v179 = vld [vmem:[#allocation3 + $0x40] sm:$0xff]
    %v180 = vld [vmem:[#allocation3 + $0x48] sm:$0xff]
    %v181 = vld [vmem:[#allocation3 + $0x50] sm:$0xff]
    %v182 = vld [vmem:[#allocation3 + $0x58] sm:$0xff]
    %v183 = vld [vmem:[#allocation3 + $0x60] sm:$0xff]
    %v184 = vld [vmem:[#allocation3 + $0x68] sm:$0xff]
    %v185 = vld [vmem:[#allocation3 + $0x70] sm:$0xff]
    %v186 = vld [vmem:[#allocation3 + $0x78] sm:$0xff]
    %v187 = vld [vmem:[#allocation3 + $0x80] sm:$0xff]
    %v188 = vld [vmem:[#allocation3 + $0x88] sm:$0xff]
    %v189 = vld [vmem:[#allocation3 + $0x90] sm:$0xff]
    %v190 = vld [vmem:[#allocation3 + $0x98] sm:$0xff]
    %v191 = vld [vmem:[#allocation3 + $0xa0] sm:$0xff]
    %v192 = vld [vmem:[#allocation3 + $0xa8] sm:$0xff]
    %v193 = vld [vmem:[#allocation3 + $0xb0] sm:$0xff]
    %v194 = vld [vmem:[#allocation3 + $0xb8] sm:$0xff]
    %v195 = vld [vmem:[#allocation3 + $0xc0] sm:$0xff]
    %v196 = vld [vmem:[#allocation3 + $0xc8] sm:$0xff]
    %v197 = vld [vmem:[#allocation3 + $0xd0] sm:$0xff]
    %v198 = vld [vmem:[#allocation3 + $0xd8] sm:$0xff]
    %v199 = vld [vmem:[#allocation3 + $0xe0] sm:$0xff]
    %v200 = vld [vmem:[#allocation3 + $0xe8] sm:$0xff]
    %v201 = vld [vmem:[#allocation3 + $0xf0] sm:$0xff]
    %v202 = vld [vmem:[#allocation3 + $0xf8] sm:$0xff]
    %v203 = vld [vmem:[#allocation3 + $0x100] sm:$0xff]
    %v204 = vld [vmem:[#allocation3 + $0x108] sm:$0xff]
    %v205 = vld [vmem:[#allocation3 + $0x110] sm:$0xff]
    %v206 = vld [vmem:[#allocation3 + $0x118] sm:$0xff]
    %v207 = vld [vmem:[#allocation3 + $0x120] sm:$0xff]
    %v208 = vld [vmem:[#allocation3 + $0x128] sm:$0xff]
    %v209 = vld [vmem:[#allocation3 + $0x130] sm:$0xff]
    %v210 = vld [vmem:[#allocation3 + $0x138] sm:$0xff]
    %v211 = vld [vmem:[#allocation3 + $0x140] sm:$0xff]
    %v212 = vld [vmem:[#allocation3 + $0x148] sm:$0xff]
    %v213 = vld [vmem:[#allocation3 + $0x150] sm:$0xff]
    %v214 = vld [vmem:[#allocation3 + $0x158] sm:$0xff]
    %v215 = vld [vmem:[#allocation3 + $0x160] sm:$0xff]
    %v216 = vld [vmem:[#allocation3 + $0x168] sm:$0xff]
    %v217 = vld [vmem:[#allocation3 + $0x170] sm:$0xff]
    %v218 = vld [vmem:[#allocation3 + $0x178] sm:$0xff]
    %v219 = vld [vmem:[#allocation3 + $0x180] sm:$0xff]
    %v220 = vld [vmem:[#allocation3 + $0x188] sm:$0xff]
    %v221 = vld [vmem:[#allocation3 + $0x190] sm:$0xff]
    %v222 = vld [vmem:[#allocation3 + $0x198] sm:$0xff]
    %v223 = vld [vmem:[#allocation3 + $0x1a0] sm:$0xff]
    %v224 = vld [vmem:[#allocation3 + $0x1a8] sm:$0xff]
    %v225 = vld [vmem:[#allocation3 + $0x1b0] sm:$0xff]
    %v226 = vld [vmem:[#allocation3 + $0x1b8] sm:$0xff]
    %v227 = vld [vmem:[#allocation3 + $0x1c0] sm:$0xff]
    %v228 = vld [vmem:[#allocation3 + $0x1c8] sm:$0xff]
    %v229 = vld [vmem:[#allocation3 + $0x1d0] sm:$0xff]
    %v230 = vld [vmem:[#allocation3 + $0x1d8] sm:$0xff]
    %v231 = vld [vmem:[#allocation3 + $0x1e0] sm:$0xff]
    %v232 = vld [vmem:[#allocation3 + $0x1e8] sm:$0xff]
    %v233 = vld [vmem:[#allocation3 + $0x1f0] sm:$0xff]
    %v234 = vld [vmem:[#allocation3 + $0x1f8] sm:$0xff]
    %v235 = vld [vmem:[#allocation3 + $0x200] sm:$0xff]
    %v236 = vld [vmem:[#allocation3 + $0x208] sm:$0xff]
    %v237 = vld [vmem:[#allocation3 + $0x210] sm:$0xff]
    %v238 = vld [vmem:[#allocation3 + $0x218] sm:$0xff]
    %v239 = vld [vmem:[#allocation3 + $0x220] sm:$0xff]
    %v240 = vld [vmem:[#allocation3 + $0x228] sm:$0xff]
    %v241 = vld [vmem:[#allocation3 + $0x230] sm:$0xff]
    %v242 = vld [vmem:[#allocation3 + $0x238] sm:$0xff]
    %v243 = vld [vmem:[#allocation3 + $0x240] sm:$0xff]
    %v244 = vld [vmem:[#allocation3 + $0x248] sm:$0xff]
    %v245 = vld [vmem:[#allocation3 + $0x250] sm:$0xff]
    %v246 = vld [vmem:[#allocation3 + $0x258] sm:$0xff]
    %v247 = vld [vmem:[#allocation3 + $0x260] sm:$0xff]
    %v248 = vld [vmem:[#allocation3 + $0x268] sm:$0xff]
    %v249 = vld [vmem:[#allocation3 + $0x270] sm:$0xff]
    %v250 = vld [vmem:[#allocation3 + $0x278] sm:$0xff]
    %v251 = vld [vmem:[#allocation3 + $0x280] sm:$0xff]
    %v252 = vld [vmem:[#allocation3 + $0x288] sm:$0xff]
    %v253 = vld [vmem:[#allocation3 + $0x290] sm:$0xff]
    %v254 = vld [vmem:[#allocation3 + $0x298] sm:$0xff]
    %v255 = vld [vmem:[#allocation3 + $0x2a0] sm:$0xff]
    %v256 = vld [vmem:[#allocation3 + $0x2a8] sm:$0xff]
    %v257 = vld [vmem:[#allocation3 + $0x2b0] sm:$0xff]
    %v258 = vld [vmem:[#allocation3 + $0x2b8] sm:$0xff]
    %v259 = vld [vmem:[#allocation3 + $0x2c0] sm:$0xff]
    %v260 = vld [vmem:[#allocation3 + $0x2c8] sm:$0xff]
    %v261 = vld [vmem:[#allocation3 + $0x2d0] sm:$0xff]
    %v262 = vld [vmem:[#allocation3 + $0x2d8] sm:$0xff]
    %v263 = vld [vmem:[#allocation3 + $0x2e0] sm:$0xff]
    %v264 = vld [vmem:[#allocation3 + $0x2e8] sm:$0xff]
    %v265 = vld [vmem:[#allocation3 + $0x2f0] sm:$0xff]
    %v266 = vld [vmem:[#allocation3 + $0x2f8] sm:$0xff]
    %v267 = vld [vmem:[#allocation3 + $0x300] sm:$0xff]
    %v268 = vld [vmem:[#allocation3 + $0x308] sm:$0xff]
    %v269 = vld [vmem:[#allocation3 + $0x310] sm:$0xff]
    %v270 = vld [vmem:[#allocation3 + $0x318] sm:$0xff]
    %v271 = vld [vmem:[#allocation3 + $0x320] sm:$0xff]
    %v272 = vld [vmem:[#allocation3 + $0x328] sm:$0xff]
    %v273 = vld [vmem:[#allocation3 + $0x330] sm:$0xff]
    %v274 = vld [vmem:[#allocation3 + $0x338] sm:$0xff]
    %v275 = vld [vmem:[#allocation3 + $0x340] sm:$0xff]
    %v276 = vld [vmem:[#allocation3 + $0x348] sm:$0xff]
    %v277 = vld [vmem:[#allocation3 + $0x350] sm:$0xff]
    %v278 = vld [vmem:[#allocation3 + $0x358] sm:$0xff]
    %v279 = vld [vmem:[#allocation3 + $0x360] sm:$0xff]
    %v280 = vld [vmem:[#allocation3 + $0x368] sm:$0xff]
    %v281 = vld [vmem:[#allocation3 + $0x370] sm:$0xff]
    %v282 = vld [vmem:[#allocation3 + $0x378] sm:$0xff]
    %v283 = vld [vmem:[#allocation3 + $0x380] sm:$0xff]
    %v284 = vld [vmem:[#allocation3 + $0x388] sm:$0xff]
    %v285 = vld [vmem:[#allocation3 + $0x390] sm:$0xff]
    %v286 = vld [vmem:[#allocation3 + $0x398] sm:$0xff]
    %v287 = vld [vmem:[#allocation3 + $0x3a0] sm:$0xff]
    %v288 = vld [vmem:[#allocation3 + $0x3a8] sm:$0xff]
    %v289 = vld [vmem:[#allocation3 + $0x3b0] sm:$0xff]
    %v290 = vld [vmem:[#allocation3 + $0x3b8] sm:$0xff]
    %v291 = vld [vmem:[#allocation3 + $0x3c0] sm:$0xff]
    %v292 = vld [vmem:[#allocation3 + $0x3c8] sm:$0xff]
    %v293 = vld [vmem:[#allocation3 + $0x3d0] sm:$0xff]
    %v294 = vld [vmem:[#allocation3 + $0x3d8] sm:$0xff]
    %v295 = vld [vmem:[#allocation3 + $0x3e0] sm:$0xff]
    %v296 = vld [vmem:[#allocation3 + $0x3e8] sm:$0xff]
    %v297 = vld [vmem:[#allocation3 + $0x3f0] sm:$0xff]
    %v298 = vld [vmem:[#allocation3 + $0x3f8] sm:$0xff]
    %v299 = vld [vmem:[#allocation3 + $0x400] sm:$0xff]
    %v300 = vld [vmem:[#allocation3 + $0x408] sm:$0xff]
    %v301 = vld [vmem:[#allocation3 + $0x410] sm:$0xff]
    %v302 = vld [vmem:[#allocation3 + $0x418] sm:$0xff]
    %v303 = vld [vmem:[#allocation3 + $0x420] sm:$0xff]
    %v304 = vld [vmem:[#allocation3 + $0x428] sm:$0xff]
    %v305 = vld [vmem:[#allocation3 + $0x430] sm:$0xff]
    %v306 = vld [vmem:[#allocation3 + $0x438] sm:$0xff]
    %v307 = vld [vmem:[#allocation3 + $0x440] sm:$0xff]
    %v308 = vld [vmem:[#allocation3 + $0x448] sm:$0xff]
    %v309 = vld [vmem:[#allocation3 + $0x450] sm:$0xff]
    %v310 = vld [vmem:[#allocation3 + $0x458] sm:$0xff]
    %v311 = vld [vmem:[#allocation3 + $0x460] sm:$0xff]
    %v312 = vld [vmem:[#allocation3 + $0x468] sm:$0xff]
    %v313 = vld [vmem:[#allocation3 + $0x470] sm:$0xff]
    %v314 = vld [vmem:[#allocation3 + $0x478] sm:$0xff]
    %v315 = vld [vmem:[#allocation6] sm:$0xff]
    %v316 = vld [vmem:[#allocation6 + $0x8] sm:$0xff]
    %v317 = vld [vmem:[#allocation6 + $0x10] sm:$0xff]
    %v318 = vld [vmem:[#allocation6 + $0x18] sm:$0xff]
    %v319 = vld [vmem:[#allocation6 + $0x20] sm:$0xff]
    %v320 = vld [vmem:[#allocation6 + $0x28] sm:$0xff]
    %v321 = vld [vmem:[#allocation6 + $0x30] sm:$0xff]
    %v322 = vld [vmem:[#allocation6 + $0x38] sm:$0xff]
    %v323 = vld [vmem:[#allocation6 + $0x40] sm:$0xff]
    %v324 = vld [vmem:[#allocation6 + $0x48] sm:$0xff]
    %v325 = vld [vmem:[#allocation6 + $0x50] sm:$0xff]
    %v326 = vld [vmem:[#allocation6 + $0x58] sm:$0xff]
    %v327 = vld [vmem:[#allocation6 + $0x60] sm:$0xff]
    %v328 = vld [vmem:[#allocation6 + $0x68] sm:$0xff]
    %v329 = vld [vmem:[#allocation6 + $0x70] sm:$0xff]
    %v330 = vld [vmem:[#allocation6 + $0x78] sm:$0xff]
    %v331 = vld [vmem:[#allocation6 + $0x80] sm:$0xff]
    %v332 = vld [vmem:[#allocation6 + $0x88] sm:$0xff]
    %v333 = vld [vmem:[#allocation6 + $0x90] sm:$0xff]
    %v334 = vld [vmem:[#allocation6 + $0x98] sm:$0xff]
    %v335 = vld [vmem:[#allocation6 + $0xa0] sm:$0xff]
    %v336 = vld [vmem:[#allocation6 + $0xa8] sm:$0xff]
    %v337 = vld [vmem:[#allocation6 + $0xb0] sm:$0xff]
    %v338 = vld [vmem:[#allocation6 + $0xb8] sm:$0xff]
    %v339 = vld [vmem:[#allocation6 + $0xc0] sm:$0xff]
    %v340 = vld [vmem:[#allocation6 + $0xc8] sm:$0xff]
    %v341 = vld [vmem:[#allocation6 + $0xd0] sm:$0xff]
    %v342 = vld [vmem:[#allocation6 + $0xd8] sm:$0xff]
    %v343 = vld [vmem:[#allocation6 + $0xe0] sm:$0xff]
    %v344 = vld [vmem:[#allocation6 + $0xe8] sm:$0xff]
    %v345 = vld [vmem:[#allocation6 + $0xf0] sm:$0xff]
    %v346 = vld [vmem:[#allocation6 + $0xf8] sm:$0xff]
    %v347 = vld [vmem:[#allocation6 + $0x100] sm:$0xff]
    %v348 = vld [vmem:[#allocation6 + $0x108] sm:$0xff]
    %v349 = vld [vmem:[#allocation6 + $0x110] sm:$0xff]
    %v350 = vld [vmem:[#allocation6 + $0x118] sm:$0xff]
    %v351 = vld [vmem:[#allocation6 + $0x120] sm:$0xff]
    %v352 = vld [vmem:[#allocation6 + $0x128] sm:$0xff]
    %v353 = vld [vmem:[#allocation6 + $0x130] sm:$0xff]
    %v354 = vld [vmem:[#allocation6 + $0x138] sm:$0xff]
    %v355 = vld [vmem:[#allocation6 + $0x140] sm:$0xff]
    %v356 = vld [vmem:[#allocation6 + $0x148] sm:$0xff]
    %v357 = vld [vmem:[#allocation6 + $0x150] sm:$0xff]
    %v358 = vld [vmem:[#allocation6 + $0x158] sm:$0xff]
    %v359 = vld [vmem:[#allocation6 + $0x160] sm:$0xff]
    %v360 = vld [vmem:[#allocation6 + $0x168] sm:$0xff]
    %v361 = vld [vmem:[#allocation6 + $0x170] sm:$0xff]
    %v362 = vld [vmem:[#allocation6 + $0x178] sm:$0xff]
    %363 = vmatprep.subr.mxu0 0.0
    %364 = vmatpush1.msra.mxu0 %v315
    %365 = vmatprep.subr.mxu0 0.0
    %366 = vmatpush1.msra.mxu0 %v316
    %367 = vmatprep.subr.mxu0 0.0
    %368 = vmatpush1.msra.mxu0 %v317
    %369 = vmatprep.subr.mxu0 0.0
    %370 = vmatpush1.msra.mxu0 %v318
    %371 = vmatprep.subr.mxu0 0.0
    %372 = vmatpush1.msra.mxu0 %v319
    %373 = vmatprep.subr.mxu0 0.0
    %374 = vmatpush1.msra.mxu0 %v320
    %375 = vmatprep.subr.mxu0 0.0
    %376 = vmatpush1.msra.mxu0 %v321
    %377 = vmatprep.subr.mxu0 0.0
    %378 = vmatpush1.msra.mxu0 %v322
    %379 = vmatprep.subr.mxu0 0.0
    %380 = vmatpush1.msra.mxu0 %v323
    %381 = vmatprep.subr.mxu0 0.0
    %382 = vmatpush1.msra.mxu0 %v324
    %383 = vmatprep.subr.mxu0 0.0
    %384 = vmatpush1.msra.mxu0 %v325
    %385 = vmatprep.subr.mxu0 0.0
    %386 = vmatpush1.msra.mxu0 %v326
    %387 = vmatprep.subr.mxu0 0.0
    %388 = vmatpush1.msra.mxu0 %v327
    %389 = vmatprep.subr.mxu0 0.0
    %390 = vmatpush1.msra.mxu0 %v328
    %391 = vmatprep.subr.mxu0 0.0
    %392 = vmatpush1.msra.mxu0 %v329
    %393 = vmatprep.subr.mxu0 0.0
    %394 = vmatpush1.msra.mxu0 %v330
    %395 = vmatprep.subr.mxu0 0.0
    %396 = vmatpush1.msra.mxu0 %v331
    %397 = vmatprep.subr.mxu0 0.0
    %398 = vmatpush1.msra.mxu0 %v332
    %399 = vmatprep.subr.mxu0 0.0
    %400 = vmatpush1.msra.mxu0 %v333
    %401 = vmatprep.subr.mxu0 0.0
    %402 = vmatpush1.msra.mxu0 %v334
    %403 = vmatprep.subr.mxu0 0.0
    %404 = vmatpush1.msra.mxu0 %v335
    %405 = vmatprep.subr.mxu0 0.0
    %406 = vmatpush1.msra.mxu0 %v336
    %407 = vmatprep.subr.mxu0 0.0
    %408 = vmatpush1.msra.mxu0 %v337
    %409 = vmatprep.subr.mxu0 0.0
    %410 = vmatpush1.msra.mxu0 %v338
    %411 = vmatprep.subr.mxu0 0.0
    %412 = vmatpush1.msra.mxu0 %v339
    %413 = vmatprep.subr.mxu0 0.0
    %414 = vmatpush1.msra.mxu0 %v340
    %415 = vmatprep.subr.mxu0 0.0
    %416 = vmatpush1.msra.mxu0 %v341
    %417 = vmatprep.subr.mxu0 0.0
    %418 = vmatpush1.msra.mxu0 %v342
    %419 = vmatprep.subr.mxu0 0.0
    %420 = vmatpush1.msra.mxu0 %v343
    %421 = vmatprep.subr.mxu0 0.0
    %422 = vmatpush1.msra.mxu0 %v344
    %423 = vmatprep.subr.mxu0 0.0
    %424 = vmatpush1.msra.mxu0 %v345
    %425 = vmatprep.subr.mxu0 0.0
    %426 = vmatpush1.msra.mxu0 %v346
    %427 = vmatprep.mubr.f32.mxu0 %v172
    %428 = vmatmul.mubr.f32.gmra.mrb[0].mxu0 %v171
    %v429 = vpop.f32.mrb[0].mxu0
    %v430 = vadd.f32 0.0, %v429
    %v431 = vpop.f32.mrb[0].mxu0
    %432 = vmatprep.mubr.f32.mxu0 %v175
    %433 = vmatmul.mubr.f32.gmra.mrb[0].mxu0 %v174
    %v434 = vpop.f32.mrb[0].mxu0
    %v435 = vadd.f32 0.0, %v434
    %v436 = vpop.f32.mrb[0].mxu0
    %437 = vmatprep.mubr.f32.mxu0 %v178
    %438 = vmatmul.mubr.f32.gmra.mrb[0].mxu0 %v177
    %v439 = vpop.f32.mrb[0].mxu0
    %v440 = vadd.f32 0.0, %v439
    %v441 = vpop.f32.mrb[0].mxu0
    %442 = vmatprep.mubr.f32.mxu0 %v181
    %443 = vmatmul.mubr.f32.gmra.mrb[0].mxu0 %v180
    %v444 = vpop.f32.mrb[0].mxu0
    %v445 = vadd.f32 0.0, %v444
    %v446 = vpop.f32.mrb[0].mxu0
    %447 = vmatprep.mubr.f32.mxu0 %v184
    %448 = vmatmul.mubr.f32.gmra.mrb[0].mxu0 %v183
    %v449 = vpop.f32.mrb[0].mxu0
    %v450 = vadd.f32 0.0, %v449
    %v451 = vpop.f32.mrb[0].mxu0
    %452 = vmatprep.mubr.f32.mxu0 %v187
    %453 = vmatmul.mubr.f32.gmra.mrb[0].mxu0 %v186
    %v454 = vpop.f32.mrb[0].mxu0
    %v455 = vadd.f32 0.0, %v454
    %v456 = vpop.f32.mrb[0].mxu0
    %457 = vmatprep.mubr.f32.mxu0 %v190
    %458 = vmatmul.mubr.f32.gmra.mrb[0].mxu0 %v189
    %v459 = vpop.f32.mrb[0].mxu0
    %v460 = vadd.f32 0.0, %v459
    %v461 = vpop.f32.mrb[0].mxu0
    %462 = vmatprep.mubr.f32.mxu0 %v193
    %463 = vmatmul.mubr.f32.gmra.mrb[0].mxu0 %v192
    %v464 = vpop.f32.mrb[0].mxu0
    %v465 = vadd.f32 0.0, %v464
    %v466 = vpop.f32.mrb[0].mxu0
    %467 = vmatprep.mubr.f32.mxu0 %v196
    %468 = vmatmul.mubr.f32.gmra.mrb[0].mxu0 %v195
    %v469 = vpop.f32.mrb[0].mxu0
    %v470 = vadd.f32 0.0, %v469
    %v471 = vpop.f32.mrb[0].mxu0
    %472 = vmatprep.mubr.f32.mxu0 %v199
    %473 = vmatmul.mubr.f32.gmra.mrb[0].mxu0 %v198
    %v474 = vpop.f32.mrb[0].mxu0
    %v475 = vadd.f32 0.0, %v474
    %v476 = vpop.f32.mrb[0].mxu0
    %477 = vmatprep.mubr.f32.mxu0 %v202
    %478 = vmatmul.mubr.f32.gmra.mrb[0].mxu0 %v201
    %v479 = vpop.f32.mrb[0].mxu0
    %v480 = vadd.f32 0.0, %v479
    %v481 = vpop.f32.mrb[0].mxu0
    %482 = vmatprep.mubr.f32.mxu0 %v205
    %483 = vmatmul.mubr.f32.gmra.mrb[0].mxu0 %v204
    %v484 = vpop.f32.mrb[0].mxu0
    %v485 = vadd.f32 0.0, %v484
    %v486 = vpop.f32.mrb[0].mxu0
    %487 = vmatprep.mubr.f32.mxu0 %v208
    %488 = vmatmul.mubr.f32.gmra.mrb[0].mxu0 %v207
    %v489 = vpop.f32.mrb[0].mxu0
    %v490 = vadd.f32 0.0, %v489
    %v491 = vpop.f32.mrb[0].mxu0
    %492 = vmatprep.mubr.f32.mxu0 %v211
    %493 = vmatmul.mubr.f32.gmra.mrb[0].mxu0 %v210
    %v494 = vpop.f32.mrb[0].mxu0
    %v495 = vadd.f32 0.0, %v494
    %v496 = vpop.f32.mrb[0].mxu0
    %497 = vmatprep.mubr.f32.mxu0 %v214
    %498 = vmatmul.mubr.f32.gmra.mrb[0].mxu0 %v213
    %v499 = vpop.f32.mrb[0].mxu0
    %v500 = vadd.f32 0.0, %v499
    %v501 = vpop.f32.mrb[0].mxu0
    %502 = vmatprep.mubr.f32.mxu0 %v217
    %503 = vmatmul.mubr.f32.gmra.mrb[0].mxu0 %v216
    %v504 = vpop.f32.mrb[0].mxu0
    %v505 = vadd.f32 0.0, %v504
    %v506 = vpop.f32.mrb[0].mxu0
    %507 = vmatprep.mubr.f32.mxu0 %v220
    %508 = vmatmul.mubr.f32.gmra.mrb[0].mxu0 %v219
    %v509 = vpop.f32.mrb[0].mxu0
    %v510 = vadd.f32 0.0, %v509
    %v511 = vpop.f32.mrb[0].mxu0
    %512 = vmatprep.mubr.f32.mxu0 %v223
    %513 = vmatmul.mubr.f32.gmra.mrb[0].mxu0 %v222
    %v514 = vpop.f32.mrb[0].mxu0
    %v515 = vadd.f32 0.0, %v514
    %v516 = vpop.f32.mrb[0].mxu0
    %517 = vmatprep.mubr.f32.mxu0 %v226
    %518 = vmatmul.mubr.f32.gmra.mrb[0].mxu0 %v225
    %v519 = vpop.f32.mrb[0].mxu0
    %v520 = vadd.f32 0.0, %v519
    %v521 = vpop.f32.mrb[0].mxu0
    %522 = vmatprep.mubr.f32.mxu0 %v229
    %523 = vmatmul.mubr.f32.gmra.mrb[0].mxu0 %v228
    %v524 = vpop.f32.mrb[0].mxu0
    %v525 = vadd.f32 0.0, %v524
    %v526 = vpop.f32.mrb[0].mxu0
    %527 = vmatprep.mubr.f32.mxu0 %v232
    %528 = vmatmul.mubr.f32.gmra.mrb[0].mxu0 %v231
    %v529 = vpop.f32.mrb[0].mxu0
    %v530 = vadd.f32 0.0, %v529
    %v531 = vpop.f32.mrb[0].mxu0
    %532 = vmatprep.mubr.f32.mxu0 %v235
    %533 = vmatmul.mubr.f32.gmra.mrb[0].mxu0 %v234
    %v534 = vpop.f32.mrb[0].mxu0
    %v535 = vadd.f32 0.0, %v534
    %v536 = vpop.f32.mrb[0].mxu0
    %537 = vmatprep.mubr.f32.mxu0 %v238
    %538 = vmatmul.mubr.f32.gmra.mrb[0].mxu0 %v237
    %v539 = vpop.f32.mrb[0].mxu0
    %v540 = vadd.f32 0.0, %v539
    %v541 = vpop.f32.mrb[0].mxu0
    %542 = vmatprep.mubr.f32.mxu0 %v241
    %543 = vmatmul.mubr.f32.gmra.mrb[0].mxu0 %v240
    %v544 = vpop.f32.mrb[0].mxu0
    %v545 = vadd.f32 0.0, %v544
    %v546 = vpop.f32.mrb[0].mxu0
    %547 = vmatprep.mubr.f32.mxu0 %v244
    %548 = vmatmul.mubr.f32.gmra.mrb[0].mxu0 %v243
    %v549 = vpop.f32.mrb[0].mxu0
    %v550 = vadd.f32 0.0, %v549
    %v551 = vpop.f32.mrb[0].mxu0
    %552 = vmatprep.mubr.f32.mxu0 %v247
    %553 = vmatmul.mubr.f32.gmra.mrb[0].mxu0 %v246
    %v554 = vpop.f32.mrb[0].mxu0
    %v555 = vadd.f32 0.0, %v554
    %v556 = vpop.f32.mrb[0].mxu0
    %557 = vmatprep.mubr.f32.mxu0 %v250
    %558 = vmatmul.mubr.f32.gmra.mrb[0].mxu0 %v249
    %v559 = vpop.f32.mrb[0].mxu0
    %v560 = vadd.f32 0.0, %v559
    %v561 = vpop.f32.mrb[0].mxu0
    %562 = vmatprep.mubr.f32.mxu0 %v253
    %563 = vmatmul.mubr.f32.gmra.mrb[0].mxu0 %v252
    %v564 = vpop.f32.mrb[0].mxu0
    %v565 = vadd.f32 0.0, %v564
    %v566 = vpop.f32.mrb[0].mxu0
    %567 = vmatprep.mubr.f32.mxu0 %v256
    %568 = vmatmul.mubr.f32.gmra.mrb[0].mxu0 %v255
    %v569 = vpop.f32.mrb[0].mxu0
    %v570 = vadd.f32 0.0, %v569
    %v571 = vpop.f32.mrb[0].mxu0
    %572 = vmatprep.mubr.f32.mxu0 %v259
    %573 = vmatmul.mubr.f32.gmra.mrb[0].mxu0 %v258
    %v574 = vpop.f32.mrb[0].mxu0
    %v575 = vadd.f32 0.0, %v574
    %v576 = vpop.f32.mrb[0].mxu0
    %577 = vmatprep.mubr.f32.mxu0 %v262
    %578 = vmatmul.mubr.f32.gmra.mrb[0].mxu0 %v261
    %v579 = vpop.f32.mrb[0].mxu0
    %v580 = vadd.f32 0.0, %v579
    %v581 = vpop.f32.mrb[0].mxu0
    %582 = vmatprep.mubr.f32.mxu0 %v265
    %583 = vmatmul.mubr.f32.gmra.mrb[0].mxu0 %v264
    %v584 = vpop.f32.mrb[0].mxu0
    %v585 = vadd.f32 0.0, %v584
    %v586 = vpop.f32.mrb[0].mxu0
    %587 = vmatprep.mubr.f32.mxu0 %v268
    %588 = vmatmul.mubr.f32.gmra.mrb[0].mxu0 %v267
    %v589 = vpop.f32.mrb[0].mxu0
    %v590 = vadd.f32 0.0, %v589
    %v591 = vpop.f32.mrb[0].mxu0
    %592 = vmatprep.mubr.f32.mxu0 %v271
    %593 = vmatmul.mubr.f32.gmra.mrb[0].mxu0 %v270
    %v594 = vpop.f32.mrb[0].mxu0
    %v595 = vadd.f32 0.0, %v594
    %v596 = vpop.f32.mrb[0].mxu0
    %597 = vmatprep.mubr.f32.mxu0 %v274
    %598 = vmatmul.mubr.f32.gmra.mrb[0].mxu0 %v273
    %v599 = vpop.f32.mrb[0].mxu0
    %v600 = vadd.f32 0.0, %v599
    %v601 = vpop.f32.mrb[0].mxu0
    %602 = vmatprep.mubr.f32.mxu0 %v277
    %603 = vmatmul.mubr.f32.gmra.mrb[0].mxu0 %v276
    %v604 = vpop.f32.mrb[0].mxu0
    %v605 = vadd.f32 0.0, %v604
    %v606 = vpop.f32.mrb[0].mxu0
    %607 = vmatprep.mubr.f32.mxu0 %v280
    %608 = vmatmul.mubr.f32.gmra.mrb[0].mxu0 %v279
    %v609 = vpop.f32.mrb[0].mxu0
    %v610 = vadd.f32 0.0, %v609
    %v611 = vpop.f32.mrb[0].mxu0
    %612 = vmatprep.mubr.f32.mxu0 %v283
    %613 = vmatmul.mubr.f32.gmra.mrb[0].mxu0 %v282
    %v614 = vpop.f32.mrb[0].mxu0
    %v615 = vadd.f32 0.0, %v614
    %v616 = vpop.f32.mrb[0].mxu0
    %617 = vmatprep.mubr.f32.mxu0 %v286
    %618 = vmatmul.mubr.f32.gmra.mrb[0].mxu0 %v285
    %v619 = vpop.f32.mrb[0].mxu0
    %v620 = vadd.f32 0.0, %v619
    %v621 = vpop.f32.mrb[0].mxu0
    %622 = vmatprep.mubr.f32.mxu0 %v289
    %623 = vmatmul.mubr.f32.gmra.mrb[0].mxu0 %v288
    %v624 = vpop.f32.mrb[0].mxu0
    %v625 = vadd.f32 0.0, %v624
    %v626 = vpop.f32.mrb[0].mxu0
    %627 = vmatprep.mubr.f32.mxu0 %v292
    %628 = vmatmul.mubr.f32.gmra.mrb[0].mxu0 %v291
    %v629 = vpop.f32.mrb[0].mxu0
    %v630 = vadd.f32 0.0, %v629
    %v631 = vpop.f32.mrb[0].mxu0
    %632 = vmatprep.mubr.f32.mxu0 %v295
    %633 = vmatmul.mubr.f32.gmra.mrb[0].mxu0 %v294
    %v634 = vpop.f32.mrb[0].mxu0
    %v635 = vadd.f32 0.0, %v634
    %v636 = vpop.f32.mrb[0].mxu0
    %637 = vmatprep.mubr.f32.mxu0 %v298
    %638 = vmatmul.mubr.f32.gmra.mrb[0].mxu0 %v297
    %v639 = vpop.f32.mrb[0].mxu0
    %v640 = vadd.f32 0.0, %v639
    %v641 = vpop.f32.mrb[0].mxu0
    %642 = vmatprep.mubr.f32.mxu0 %v301
    %643 = vmatmul.mubr.f32.gmra.mrb[0].mxu0 %v300
    %v644 = vpop.f32.mrb[0].mxu0
    %v645 = vadd.f32 0.0, %v644
    %v646 = vpop.f32.mrb[0].mxu0
    %647 = vmatprep.mubr.f32.mxu0 %v304
    %648 = vmatmul.mubr.f32.gmra.mrb[0].mxu0 %v303
    %v649 = vpop.f32.mrb[0].mxu0
    %v650 = vadd.f32 0.0, %v649
    %v651 = vpop.f32.mrb[0].mxu0
    %652 = vmatprep.mubr.f32.mxu0 %v307
    %653 = vmatmul.mubr.f32.gmra.mrb[0].mxu0 %v306
    %v654 = vpop.f32.mrb[0].mxu0
    %v655 = vadd.f32 0.0, %v654
    %v656 = vpop.f32.mrb[0].mxu0
    %657 = vmatprep.mubr.f32.mxu0 %v310
    %658 = vmatmul.mubr.f32.gmra.mrb[0].mxu0 %v309
    %v659 = vpop.f32.mrb[0].mxu0
    %v660 = vadd.f32 0.0, %v659
    %v661 = vpop.f32.mrb[0].mxu0
    %662 = vmatprep.mubr.f32.mxu0 %v313
    %663 = vmatmul.mubr.f32.gmra.mrb[0].mxu0 %v312
    %v664 = vpop.f32.mrb[0].mxu0
    %v665 = vadd.f32 0.0, %v664
    %v666 = vpop.f32.mrb[0].mxu0
    %667 = vdwg.mxu0
    %668 = vmatprep.subr.mxu0 0.0
    %669 = vmatpush1.msra.mxu0 %v347
    %670 = vmatprep.subr.mxu0 0.0
    %671 = vmatpush1.msra.mxu0 %v348
    %672 = vmatprep.subr.mxu0 0.0
    %673 = vmatpush1.msra.mxu0 %v349
    %674 = vmatprep.subr.mxu0 0.0
    %675 = vmatpush1.msra.mxu0 %v350
    %676 = vmatprep.subr.mxu0 0.0
    %677 = vmatpush1.msra.mxu0 %v351
    %678 = vmatprep.subr.mxu0 0.0
    %679 = vmatpush1.msra.mxu0 %v352
    %680 = vmatprep.subr.mxu0 0.0
    %681 = vmatpush1.msra.mxu0 %v353
    %682 = vmatprep.subr.mxu0 0.0
    %683 = vmatpush1.msra.mxu0 %v354
    %684 = vmatprep.subr.mxu0 0.0
    %685 = vmatpush1.msra.mxu0 %v355
    %686 = vmatprep.subr.mxu0 0.0
    %687 = vmatpush1.msra.mxu0 %v356
    %688 = vmatprep.subr.mxu0 0.0
    %689 = vmatpush1.msra.mxu0 %v357
    %690 = vmatprep.subr.mxu0 0.0
    %691 = vmatpush1.msra.mxu0 %v358
    %692 = vmatprep.subr.mxu0 0.0
    %693 = vmatpush1.msra.mxu0 %v359
    %694 = vmatprep.subr.mxu0 0.0
    %695 = vmatpush1.msra.mxu0 %v360
    %696 = vmatprep.subr.mxu0 0.0
    %697 = vmatpush1.msra.mxu0 %v361
    %698 = vmatprep.subr.mxu0 0.0
    %699 = vmatpush1.msra.mxu0 %v362
    %700 = vmatprep.subr.mxu0 0.0
    %701 = vmatpush1.msra.mxu0 0.0
    %702 = vmatprep.subr.mxu0 0.0
    %703 = vmatpush1.msra.mxu0 0.0
    %704 = vmatprep.subr.mxu0 0.0
    %705 = vmatpush1.msra.mxu0 0.0
    %706 = vmatprep.subr.mxu0 0.0
    %707 = vmatpush1.msra.mxu0 0.0
    %708 = vmatprep.subr.mxu0 0.0
    %709 = vmatpush1.msra.mxu0 0.0
    %710 = vmatprep.subr.mxu0 0.0
    %711 = vmatpush1.msra.mxu0 0.0
    %712 = vmatprep.subr.mxu0 0.0
    %713 = vmatpush1.msra.mxu0 0.0
    %714 = vmatprep.subr.mxu0 0.0
    %715 = vmatpush1.msra.mxu0 0.0
    %716 = vmatprep.subr.mxu0 0.0
    %717 = vmatpush1.msra.mxu0 0.0
    %718 = vmatprep.subr.mxu0 0.0
    %719 = vmatpush1.msra.mxu0 0.0
    %720 = vmatprep.subr.mxu0 0.0
    %721 = vmatpush1.msra.mxu0 0.0
    %722 = vmatprep.subr.mxu0 0.0
    %723 = vmatpush1.msra.mxu0 0.0
    %724 = vmatprep.subr.mxu0 0.0
    %725 = vmatpush1.msra.mxu0 0.0
    %726 = vmatprep.subr.mxu0 0.0
    %727 = vmatpush1.msra.mxu0 0.0
    %728 = vmatprep.subr.mxu0 0.0
    %729 = vmatpush1.msra.mxu0 0.0
    %730 = vmatprep.subr.mxu0 0.0
    %731 = vmatpush1.msra.mxu0 0.0
    %732 = vmatprep.mubr.f32.mxu0 0.0
    %733 = vmatmul.mubr.f32.gmra.mrb[0].mxu0 %v173
    %v734 = vpop.f32.mrb[0].mxu0
    %v735 = vadd.f32 %v430, %v734
    %v736 = vpop.f32.mrb[0].mxu0
    %737 = vmatprep.mubr.f32.mxu0 0.0
    %738 = vmatmul.mubr.f32.gmra.mrb[0].mxu0 %v176
    %v739 = vpop.f32.mrb[0].mxu0
    %v740 = vadd.f32 %v435, %v739
    %v741 = vpop.f32.mrb[0].mxu0
    %742 = vmatprep.mubr.f32.mxu0 0.0
    %743 = vmatmul.mubr.f32.gmra.mrb[0].mxu0 %v179
    %v744 = vpop.f32.mrb[0].mxu0
    %v745 = vadd.f32 %v440, %v744
    %v746 = vpop.f32.mrb[0].mxu0
    %747 = vmatprep.mubr.f32.mxu0 0.0
    %748 = vmatmul.mubr.f32.gmra.mrb[0].mxu0 %v182
    %v749 = vpop.f32.mrb[0].mxu0
    %v750 = vadd.f32 %v445, %v749
    %v751 = vpop.f32.mrb[0].mxu0
    %752 = vmatprep.mubr.f32.mxu0 0.0
    %753 = vmatmul.mubr.f32.gmra.mrb[0].mxu0 %v185
    %v754 = vpop.f32.mrb[0].mxu0
    %v755 = vadd.f32 %v450, %v754
    %v756 = vpop.f32.mrb[0].mxu0
    %757 = vmatprep.mubr.f32.mxu0 0.0
    %758 = vmatmul.mubr.f32.gmra.mrb[0].mxu0 %v188
    %v759 = vpop.f32.mrb[0].mxu0
    %v760 = vadd.f32 %v455, %v759
    %v761 = vpop.f32.mrb[0].mxu0
    %762 = vmatprep.mubr.f32.mxu0 0.0
    %763 = vmatmul.mubr.f32.gmra.mrb[0].mxu0 %v191
    %v764 = vpop.f32.mrb[0].mxu0
    %v765 = vadd.f32 %v460, %v764
    %v766 = vpop.f32.mrb[0].mxu0
    %767 = vmatprep.mubr.f32.mxu0 0.0
    %768 = vmatmul.mubr.f32.gmra.mrb[0].mxu0 %v194
    %v769 = vpop.f32.mrb[0].mxu0
    %v770 = vadd.f32 %v465, %v769
    %v771 = vpop.f32.mrb[0].mxu0
    %772 = vmatprep.mubr.f32.mxu0 0.0
    %773 = vmatmul.mubr.f32.gmra.mrb[0].mxu0 %v197
    %v774 = vpop.f32.mrb[0].mxu0
    %v775 = vadd.f32 %v470, %v774
    %v776 = vpop.f32.mrb[0].mxu0
    %777 = vmatprep.mubr.f32.mxu0 0.0
    %778 = vmatmul.mubr.f32.gmra.mrb[0].mxu0 %v200
    %v779 = vpop.f32.mrb[0].mxu0
    %v780 = vadd.f32 %v475, %v779
    %v781 = vpop.f32.mrb[0].mxu0
    %782 = vmatprep.mubr.f32.mxu0 0.0
    %783 = vmatmul.mubr.f32.gmra.mrb[0].mxu0 %v203
    %v784 = vpop.f32.mrb[0].mxu0
    %v785 = vadd.f32 %v480, %v784
    %v786 = vpop.f32.mrb[0].mxu0
    %787 = vmatprep.mubr.f32.mxu0 0.0
    %788 = vmatmul.mubr.f32.gmra.mrb[0].mxu0 %v206
    %v789 = vpop.f32.mrb[0].mxu0
    %v790 = vadd.f32 %v485, %v789
    %v791 = vpop.f32.mrb[0].mxu0
    %792 = vmatprep.mubr.f32.mxu0 0.0
    %793 = vmatmul.mubr.f32.gmra.mrb[0].mxu0 %v209
    %v794 = vpop.f32.mrb[0].mxu0
    %v795 = vadd.f32 %v490, %v794
    %v796 = vpop.f32.mrb[0].mxu0
    %797 = vmatprep.mubr.f32.mxu0 0.0
    %798 = vmatmul.mubr.f32.gmra.mrb[0].mxu0 %v212
    %v799 = vpop.f32.mrb[0].mxu0
    %v800 = vadd.f32 %v495, %v799
    %v801 = vpop.f32.mrb[0].mxu0
    %802 = vmatprep.mubr.f32.mxu0 0.0
    %803 = vmatmul.mubr.f32.gmra.mrb[0].mxu0 %v215
    %v804 = vpop.f32.mrb[0].mxu0
    %v805 = vadd.f32 %v500, %v804
    %v806 = vpop.f32.mrb[0].mxu0
    %807 = vmatprep.mubr.f32.mxu0 0.0
    %808 = vmatmul.mubr.f32.gmra.mrb[0].mxu0 %v218
    %v809 = vpop.f32.mrb[0].mxu0
    %v810 = vadd.f32 %v505, %v809
    %v811 = vpop.f32.mrb[0].mxu0
    %812 = vmatprep.mubr.f32.mxu0 0.0
    %813 = vmatmul.mubr.f32.gmra.mrb[0].mxu0 %v221
    %v814 = vpop.f32.mrb[0].mxu0
    %v815 = vadd.f32 %v510, %v814
    %v816 = vpop.f32.mrb[0].mxu0
    %817 = vmatprep.mubr.f32.mxu0 0.0
    %818 = vmatmul.mubr.f32.gmra.mrb[0].mxu0 %v224
    %v819 = vpop.f32.mrb[0].mxu0
    %v820 = vadd.f32 %v515, %v819
    %v821 = vpop.f32.mrb[0].mxu0
    %822 = vmatprep.mubr.f32.mxu0 0.0
    %823 = vmatmul.mubr.f32.gmra.mrb[0].mxu0 %v227
    %v824 = vpop.f32.mrb[0].mxu0
    %v825 = vadd.f32 %v520, %v824
    %v826 = vpop.f32.mrb[0].mxu0
    %827 = vmatprep.mubr.f32.mxu0 0.0
    %828 = vmatmul.mubr.f32.gmra.mrb[0].mxu0 %v230
    %v829 = vpop.f32.mrb[0].mxu0
    %v830 = vadd.f32 %v525, %v829
    %v831 = vpop.f32.mrb[0].mxu0
    %832 = vmatprep.mubr.f32.mxu0 0.0
    %833 = vmatmul.mubr.f32.gmra.mrb[0].mxu0 %v233
    %v834 = vpop.f32.mrb[0].mxu0
    %v835 = vadd.f32 %v530, %v834
    %v836 = vpop.f32.mrb[0].mxu0
    %837 = vmatprep.mubr.f32.mxu0 0.0
    %838 = vmatmul.mubr.f32.gmra.mrb[0].mxu0 %v236
    %v839 = vpop.f32.mrb[0].mxu0
    %v840 = vadd.f32 %v535, %v839
    %v841 = vpop.f32.mrb[0].mxu0
    %842 = vmatprep.mubr.f32.mxu0 0.0
    %843 = vmatmul.mubr.f32.gmra.mrb[0].mxu0 %v239
    %v844 = vpop.f32.mrb[0].mxu0
    %v845 = vadd.f32 %v540, %v844
    %v846 = vpop.f32.mrb[0].mxu0
    %847 = vmatprep.mubr.f32.mxu0 0.0
    %848 = vmatmul.mubr.f32.gmra.mrb[0].mxu0 %v242
    %v849 = vpop.f32.mrb[0].mxu0
    %v850 = vadd.f32 %v545, %v849
    %v851 = vpop.f32.mrb[0].mxu0
    %852 = vmatprep.mubr.f32.mxu0 0.0
    %853 = vmatmul.mubr.f32.gmra.mrb[0].mxu0 %v245
    %v854 = vpop.f32.mrb[0].mxu0
    %v855 = vadd.f32 %v550, %v854
    %v856 = vpop.f32.mrb[0].mxu0
    %857 = vmatprep.mubr.f32.mxu0 0.0
    %858 = vmatmul.mubr.f32.gmra.mrb[0].mxu0 %v248
    %v859 = vpop.f32.mrb[0].mxu0
    %v860 = vadd.f32 %v555, %v859
    %v861 = vpop.f32.mrb[0].mxu0
    %862 = vmatprep.mubr.f32.mxu0 0.0
    %863 = vmatmul.mubr.f32.gmra.mrb[0].mxu0 %v251
    %v864 = vpop.f32.mrb[0].mxu0
    %v865 = vadd.f32 %v560, %v864
    %v866 = vpop.f32.mrb[0].mxu0
    %867 = vmatprep.mubr.f32.mxu0 0.0
    %868 = vmatmul.mubr.f32.gmra.mrb[0].mxu0 %v254
    %v869 = vpop.f32.mrb[0].mxu0
    %v870 = vadd.f32 %v565, %v869
    %v871 = vpop.f32.mrb[0].mxu0
    %872 = vmatprep.mubr.f32.mxu0 0.0
    %873 = vmatmul.mubr.f32.gmra.mrb[0].mxu0 %v257
    %v874 = vpop.f32.mrb[0].mxu0
    %v875 = vadd.f32 %v570, %v874
    %v876 = vpop.f32.mrb[0].mxu0
    %877 = vmatprep.mubr.f32.mxu0 0.0
    %878 = vmatmul.mubr.f32.gmra.mrb[0].mxu0 %v260
    %v879 = vpop.f32.mrb[0].mxu0
    %v880 = vadd.f32 %v575, %v879
    %v881 = vpop.f32.mrb[0].mxu0
    %882 = vmatprep.mubr.f32.mxu0 0.0
    %883 = vmatmul.mubr.f32.gmra.mrb[0].mxu0 %v263
    %v884 = vpop.f32.mrb[0].mxu0
    %v885 = vadd.f32 %v580, %v884
    %v886 = vpop.f32.mrb[0].mxu0
    %887 = vmatprep.mubr.f32.mxu0 0.0
    %888 = vmatmul.mubr.f32.gmra.mrb[0].mxu0 %v266
    %v889 = vpop.f32.mrb[0].mxu0
    %v890 = vadd.f32 %v585, %v889
    %v891 = vpop.f32.mrb[0].mxu0
    %892 = vmatprep.mubr.f32.mxu0 0.0
    %893 = vmatmul.mubr.f32.gmra.mrb[0].mxu0 %v269
    %v894 = vpop.f32.mrb[0].mxu0
    %v895 = vadd.f32 %v590, %v894
    %v896 = vpop.f32.mrb[0].mxu0
    %897 = vmatprep.mubr.f32.mxu0 0.0
    %898 = vmatmul.mubr.f32.gmra.mrb[0].mxu0 %v272
    %v899 = vpop.f32.mrb[0].mxu0
    %v900 = vadd.f32 %v595, %v899
    %v901 = vpop.f32.mrb[0].mxu0
    %902 = vmatprep.mubr.f32.mxu0 0.0
    %903 = vmatmul.mubr.f32.gmra.mrb[0].mxu0 %v275
    %v904 = vpop.f32.mrb[0].mxu0
    %v905 = vadd.f32 %v600, %v904
    %v906 = vpop.f32.mrb[0].mxu0
    %907 = vmatprep.mubr.f32.mxu0 0.0
    %908 = vmatmul.mubr.f32.gmra.mrb[0].mxu0 %v278
    %v909 = vpop.f32.mrb[0].mxu0
    %v910 = vadd.f32 %v605, %v909
    %v911 = vpop.f32.mrb[0].mxu0
    %912 = vmatprep.mubr.f32.mxu0 0.0
    %913 = vmatmul.mubr.f32.gmra.mrb[0].mxu0 %v281
    %v914 = vpop.f32.mrb[0].mxu0
    %v915 = vadd.f32 %v610, %v914
    %v916 = vpop.f32.mrb[0].mxu0
    %917 = vmatprep.mubr.f32.mxu0 0.0
    %918 = vmatmul.mubr.f32.gmra.mrb[0].mxu0 %v284
    %v919 = vpop.f32.mrb[0].mxu0
    %v920 = vadd.f32 %v615, %v919
    %v921 = vpop.f32.mrb[0].mxu0
    %922 = vmatprep.mubr.f32.mxu0 0.0
    %923 = vmatmul.mubr.f32.gmra.mrb[0].mxu0 %v287
    %v924 = vpop.f32.mrb[0].mxu0
    %v925 = vadd.f32 %v620, %v924
    %v926 = vpop.f32.mrb[0].mxu0
    %927 = vmatprep.mubr.f32.mxu0 0.0
    %928 = vmatmul.mubr.f32.gmra.mrb[0].mxu0 %v290
    %v929 = vpop.f32.mrb[0].mxu0
    %v930 = vadd.f32 %v625, %v929
    %v931 = vpop.f32.mrb[0].mxu0
    %932 = vmatprep.mubr.f32.mxu0 0.0
    %933 = vmatmul.mubr.f32.gmra.mrb[0].mxu0 %v293
    %v934 = vpop.f32.mrb[0].mxu0
    %v935 = vadd.f32 %v630, %v934
    %v936 = vpop.f32.mrb[0].mxu0
    %937 = vmatprep.mubr.f32.mxu0 0.0
    %938 = vmatmul.mubr.f32.gmra.mrb[0].mxu0 %v296
    %v939 = vpop.f32.mrb[0].mxu0
    %v940 = vadd.f32 %v635, %v939
    %v941 = vpop.f32.mrb[0].mxu0
    %942 = vmatprep.mubr.f32.mxu0 0.0
    %943 = vmatmul.mubr.f32.gmra.mrb[0].mxu0 %v299
    %v944 = vpop.f32.mrb[0].mxu0
    %v945 = vadd.f32 %v640, %v944
    %v946 = vpop.f32.mrb[0].mxu0
    %947 = vmatprep.mubr.f32.mxu0 0.0
    %948 = vmatmul.mubr.f32.gmra.mrb[0].mxu0 %v302
    %v949 = vpop.f32.mrb[0].mxu0
    %v950 = vadd.f32 %v645, %v949
    %v951 = vpop.f32.mrb[0].mxu0
    %952 = vmatprep.mubr.f32.mxu0 0.0
    %953 = vmatmul.mubr.f32.gmra.mrb[0].mxu0 %v305
    %v954 = vpop.f32.mrb[0].mxu0
    %v955 = vadd.f32 %v650, %v954
    %v956 = vpop.f32.mrb[0].mxu0
    %957 = vmatprep.mubr.f32.mxu0 0.0
    %958 = vmatmul.mubr.f32.gmra.mrb[0].mxu0 %v308
    %v959 = vpop.f32.mrb[0].mxu0
    %v960 = vadd.f32 %v655, %v959
    %v961 = vpop.f32.mrb[0].mxu0
    %962 = vmatprep.mubr.f32.mxu0 0.0
    %963 = vmatmul.mubr.f32.gmra.mrb[0].mxu0 %v311
    %v964 = vpop.f32.mrb[0].mxu0
    %v965 = vadd.f32 %v660, %v964
    %v966 = vpop.f32.mrb[0].mxu0
    %967 = vmatprep.mubr.f32.mxu0 0.0
    %968 = vmatmul.mubr.f32.gmra.mrb[0].mxu0 %v314
    %v969 = vpop.f32.mrb[0].mxu0
    %v970 = vadd.f32 %v665, %v969
    %v971 = vpop.f32.mrb[0].mxu0
    %972 = vdwg.mxu0
    %v973 = vadd.f32 %v123, %v735
    %v974 = vadd.f32 %v124, %v740
    %v975 = vadd.f32 %v125, %v745
    %v976 = vadd.f32 %v126, %v750
    %v977 = vadd.f32 %v127, %v755
    %v978 = vadd.f32 %v128, %v760
    %v979 = vadd.f32 %v129, %v765
    %v980 = vadd.f32 %v130, %v770
    %v981 = vadd.f32 %v131, %v775
    %v982 = vadd.f32 %v132, %v780
    %v983 = vadd.f32 %v133, %v785
    %v984 = vadd.f32 %v134, %v790
    %v985 = vadd.f32 %v135, %v795
    %v986 = vadd.f32 %v136, %v800
    %v987 = vadd.f32 %v137, %v805
    %v988 = vadd.f32 %v138, %v810
    %v989 = vadd.f32 %v139, %v815
    %v990 = vadd.f32 %v140, %v820
    %v991 = vadd.f32 %v141, %v825
    %v992 = vadd.f32 %v142, %v830
    %v993 = vadd.f32 %v143, %v835
    %v994 = vadd.f32 %v144, %v840
    %v995 = vadd.f32 %v145, %v845
    %v996 = vadd.f32 %v146, %v850
    %v997 = vadd.f32 %v147, %v855
    %v998 = vadd.f32 %v148, %v860
    %v999 = vadd.f32 %v149, %v865
    %v1000 = vadd.f32 %v150, %v870
    %v1001 = vadd.f32 %v151, %v875
    %v1002 = vadd.f32 %v152, %v880
    %v1003 = vadd.f32 %v153, %v885
    %v1004 = vadd.f32 %v154, %v890
    %v1005 = vadd.f32 %v155, %v895
    %v1006 = vadd.f32 %v156, %v900
    %v1007 = vadd.f32 %v157, %v905
    %v1008 = vadd.f32 %v158, %v910
    %v1009 = vadd.f32 %v159, %v915
    %v1010 = vadd.f32 %v160, %v920
    %v1011 = vadd.f32 %v161, %v925
    %v1012 = vadd.f32 %v162, %v930
    %v1013 = vadd.f32 %v163, %v935
    %v1014 = vadd.f32 %v164, %v940
    %v1015 = vadd.f32 %v165, %v945
    %v1016 = vadd.f32 %v166, %v950
    %v1017 = vadd.f32 %v167, %v955
    %v1018 = vadd.f32 %v168, %v960
    %v1019 = vadd.f32 %v169, %v965
    %v1020 = vadd.f32 %v170, %v970
    %1021 = vst [vmem:[#allocation2] sm:$0xff] %v973
    %1022 = vst [vmem:[#allocation2 + $0x8] sm:$0xff] %v974
    %1023 = vst [vmem:[#allocation2 + $0x10] sm:$0xff] %v975
    %1024 = vst [vmem:[#allocation2 + $0x18] sm:$0xff] %v976
    %1025 = vst [vmem:[#allocation2 + $0x20] sm:$0xff] %v977
    %1026 = vst [vmem:[#allocation2 + $0x28] sm:$0xff] %v978
    %1027 = vst [vmem:[#allocation2 + $0x30] sm:$0xff] %v979
    %1028 = vst [vmem:[#allocation2 + $0x38] sm:$0xff] %v980
    %1029 = vst [vmem:[#allocation2 + $0x40] sm:$0xff] %v981
    %1030 = vst [vmem:[#allocation2 + $0x48] sm:$0xff] %v982
    %1031 = vst [vmem:[#allocation2 + $0x50] sm:$0xff] %v983
    %1032 = vst [vmem:[#allocation2 + $0x58] sm:$0xff] %v984
    %1033 = vst [vmem:[#allocation2 + $0x60] sm:$0xff] %v985
    %1034 = vst [vmem:[#allocation2 + $0x68] sm:$0xff] %v986
    %1035 = vst [vmem:[#allocation2 + $0x70] sm:$0xff] %v987
    %1036 = vst [vmem:[#allocation2 + $0x78] sm:$0xff] %v988
    %1037 = vst [vmem:[#allocation2 + $0x80] sm:$0xff] %v989
    %1038 = vst [vmem:[#allocation2 + $0x88] sm:$0xff] %v990
    %1039 = vst [vmem:[#allocation2 + $0x90] sm:$0xff] %v991
    %1040 = vst [vmem:[#allocation2 + $0x98] sm:$0xff] %v992
    %1041 = vst [vmem:[#allocation2 + $0xa0] sm:$0xff] %v993
    %1042 = vst [vmem:[#allocation2 + $0xa8] sm:$0xff] %v994
    %1043 = vst [vmem:[#allocation2 + $0xb0] sm:$0xff] %v995
    %1044 = vst [vmem:[#allocation2 + $0xb8] sm:$0xff] %v996
    %1045 = vst [vmem:[#allocation2 + $0xc0] sm:$0xff] %v997
    %1046 = vst [vmem:[#allocation2 + $0xc8] sm:$0xff] %v998
    %1047 = vst [vmem:[#allocation2 + $0xd0] sm:$0xff] %v999
    %1048 = vst [vmem:[#allocation2 + $0xd8] sm:$0xff] %v1000
    %1049 = vst [vmem:[#allocation2 + $0xe0] sm:$0xff] %v1001
    %1050 = vst [vmem:[#allocation2 + $0xe8] sm:$0xff] %v1002
    %1051 = vst [vmem:[#allocation2 + $0xf0] sm:$0xff] %v1003
    %1052 = vst [vmem:[#allocation2 + $0xf8] sm:$0xff] %v1004
    %1053 = vst [vmem:[#allocation2 + $0x100] sm:$0xff] %v1005
    %1054 = vst [vmem:[#allocation2 + $0x108] sm:$0xff] %v1006
    %1055 = vst [vmem:[#allocation2 + $0x110] sm:$0xff] %v1007
    %1056 = vst [vmem:[#allocation2 + $0x118] sm:$0xff] %v1008
    %1057 = vst [vmem:[#allocation2 + $0x120] sm:$0xff] %v1009
    %1058 = vst [vmem:[#allocation2 + $0x128] sm:$0xff] %v1010
    %1059 = vst [vmem:[#allocation2 + $0x130] sm:$0xff] %v1011
    %1060 = vst [vmem:[#allocation2 + $0x138] sm:$0xff] %v1012
    %1061 = vst [vmem:[#allocation2 + $0x140] sm:$0xff] %v1013
    %1062 = vst [vmem:[#allocation2 + $0x148] sm:$0xff] %v1014
    %1063 = vst [vmem:[#allocation2 + $0x150] sm:$0xff] %v1015
    %1064 = vst [vmem:[#allocation2 + $0x158] sm:$0xff] %v1016
    %1065 = vst [vmem:[#allocation2 + $0x160] sm:$0xff] %v1017
    %1066 = vst [vmem:[#allocation2 + $0x168] sm:$0xff] %v1018
    %1067 = vst [vmem:[#allocation2 + $0x170] sm:$0xff] %v1019
    %1068 = vst [vmem:[#allocation2 + $0x178] sm:$0xff] %v1020
    // Predicated region
    $region38: #{tpu_custom_call.1} parent=1 // pred_check
      %p1069 = pneg %p71
    $region39: #{tpu_custom_call.1} parent=1 // pred_check_branch
      %1071 = sbr.rel (%p1069) target = $region41
    $region40: #{tpu_custom_call.1} parent=1 // pred_region
      %v1072 = vld [vmem:[#allocation2] sm:$0xff]
      %v1073 = vld [vmem:[#allocation2 + $0x8] sm:$0xff]
      %v1074 = vld [vmem:[#allocation2 + $0x10] sm:$0xff]
      %v1075 = vld [vmem:[#allocation2 + $0x18] sm:$0xff]
      %v1076 = vld [vmem:[#allocation2 + $0x20] sm:$0xff]
      %v1077 = vld [vmem:[#allocation2 + $0x28] sm:$0xff]
      %v1078 = vld [vmem:[#allocation2 + $0x30] sm:$0xff]
      %v1079 = vld [vmem:[#allocation2 + $0x38] sm:$0xff]
      %v1080 = vld [vmem:[#allocation2 + $0x40] sm:$0xff]
      %v1081 = vld [vmem:[#allocation2 + $0x48] sm:$0xff]
      %v1082 = vld [vmem:[#allocation2 + $0x50] sm:$0xff]
      %v1083 = vld [vmem:[#allocation2 + $0x58] sm:$0xff]
      %v1084 = vld [vmem:[#allocation2 + $0x60] sm:$0xff]
      %v1085 = vld [vmem:[#allocation2 + $0x68] sm:$0xff]
      %v1086 = vld [vmem:[#allocation2 + $0x70] sm:$0xff]
      %v1087 = vld [vmem:[#allocation2 + $0x78] sm:$0xff]
      %v1088 = vld [vmem:[#allocation2 + $0x80] sm:$0xff]
      %v1089 = vld [vmem:[#allocation2 + $0x88] sm:$0xff]
      %v1090 = vld [vmem:[#allocation2 + $0x90] sm:$0xff]
      %v1091 = vld [vmem:[#allocation2 + $0x98] sm:$0xff]
      %v1092 = vld [vmem:[#allocation2 + $0xa0] sm:$0xff]
      %v1093 = vld [vmem:[#allocation2 + $0xa8] sm:$0xff]
      %v1094 = vld [vmem:[#allocation2 + $0xb0] sm:$0xff]
      %v1095 = vld [vmem:[#allocation2 + $0xb8] sm:$0xff]
      %v1096 = vld [vmem:[#allocation2 + $0xc0] sm:$0xff]
      %v1097 = vld [vmem:[#allocation2 + $0xc8] sm:$0xff]
      %v1098 = vld [vmem:[#allocation2 + $0xd0] sm:$0xff]
      %v1099 = vld [vmem:[#allocation2 + $0xd8] sm:$0xff]
      %v1100 = vld [vmem:[#allocation2 + $0xe0] sm:$0xff]
      %v1101 = vld [vmem:[#allocation2 + $0xe8] sm:$0xff]
      %v1102 = vld [vmem:[#allocation2 + $0xf0] sm:$0xff]
      %v1103 = vld [vmem:[#allocation2 + $0xf8] sm:$0xff]
      %v1104 = vld [vmem:[#allocation2 + $0x100] sm:$0xff]
      %v1105 = vld [vmem:[#allocation2 + $0x108] sm:$0xff]
      %v1106 = vld [vmem:[#allocation2 + $0x110] sm:$0xff]
      %v1107 = vld [vmem:[#allocation2 + $0x118] sm:$0xff]
      %v1108 = vld [vmem:[#allocation2 + $0x120] sm:$0xff]
      %v1109 = vld [vmem:[#allocation2 + $0x128] sm:$0xff]
      %v1110 = vld [vmem:[#allocation2 + $0x130] sm:$0xff]
      %v1111 = vld [vmem:[#allocation2 + $0x138] sm:$0xff]
      %v1112 = vld [vmem:[#allocation2 + $0x140] sm:$0xff]
      %v1113 = vld [vmem:[#allocation2 + $0x148] sm:$0xff]
      %v1114 = vld [vmem:[#allocation2 + $0x150] sm:$0xff]
      %v1115 = vld [vmem:[#allocation2 + $0x158] sm:$0xff]
      %v1116 = vld [vmem:[#allocation2 + $0x160] sm:$0xff]
      %v1117 = vld [vmem:[#allocation2 + $0x168] sm:$0xff]
      %v1118 = vld [vmem:[#allocation2 + $0x170] sm:$0xff]
      %v1119 = vld [vmem:[#allocation2 + $0x178] sm:$0xff]
      %v1120 = vld [vmem:[#allocation8] sm:$0xff]
      %v1121 = vld [vmem:[#allocation8 + $0x8] sm:$0xff]
      %v1122 = vld [vmem:[#allocation8 + $0x10] sm:$0xff]
      %v1123 = vld [vmem:[#allocation8 + $0x18] sm:$0xff]
      %v1124 = vld [vmem:[#allocation8 + $0x20] sm:$0xff]
      %v1125 = vld [vmem:[#allocation8 + $0x28] sm:$0xff]
      %v1126 = vld [vmem:[#allocation8 + $0x30] sm:$0xff]
      %v1127 = vld [vmem:[#allocation8 + $0x38] sm:$0xff]
      %v1128 = vld [vmem:[#allocation8 + $0x40] sm:$0xff]
      %v1129 = vld [vmem:[#allocation8 + $0x48] sm:$0xff]
      %v1130 = vld [vmem:[#allocation8 + $0x50] sm:$0xff]
      %v1131 = vld [vmem:[#allocation8 + $0x58] sm:$0xff]
      %v1132 = vld [vmem:[#allocation8 + $0x60] sm:$0xff]
      %v1133 = vld [vmem:[#allocation8 + $0x68] sm:$0xff]
      %v1134 = vld [vmem:[#allocation8 + $0x70] sm:$0xff]
      %v1135 = vld [vmem:[#allocation8 + $0x78] sm:$0xff]
      %v1136 = vld [vmem:[#allocation9] sm:$0x1]
      %v1138 = vlaneseq
      %v1139 = vshrl.u32 %v1138, 7
      %v1140 = vsub.s32 0, %v1139
      %v1141 = vrot.slane %v1136, %v1140
      %1143 = vmatprep.subr.mxu0 0.0
      %1144 = vmatpush1.msra.mxu0 %v1120
      %1145 = vmatprep.subr.mxu0 0.0
      %1146 = vmatpush1.msra.mxu0 %v1121
      %1147 = vmatprep.subr.mxu0 0.0
      %1148 = vmatpush1.msra.mxu0 %v1122
      %1149 = vmatprep.subr.mxu0 0.0
      %1150 = vmatpush1.msra.mxu0 %v1123
      %1151 = vmatprep.subr.mxu0 0.0
      %1152 = vmatpush1.msra.mxu0 %v1124
      %1153 = vmatprep.subr.mxu0 0.0
      %1154 = vmatpush1.msra.mxu0 %v1125
      %1155 = vmatprep.subr.mxu0 0.0
      %1156 = vmatpush1.msra.mxu0 %v1126
      %1157 = vmatprep.subr.mxu0 0.0
      %1158 = vmatpush1.msra.mxu0 %v1127
      %1159 = vmatprep.subr.mxu0 0.0
      %1160 = vmatpush1.msra.mxu0 %v1128
      %1161 = vmatprep.subr.mxu0 0.0
      %1162 = vmatpush1.msra.mxu0 %v1129
      %1163 = vmatprep.subr.mxu0 0.0
      %1164 = vmatpush1.msra.mxu0 %v1130
      %1165 = vmatprep.subr.mxu0 0.0
      %1166 = vmatpush1.msra.mxu0 %v1131
      %1167 = vmatprep.subr.mxu0 0.0
      %1168 = vmatpush1.msra.mxu0 %v1132
      %1169 = vmatprep.subr.mxu0 0.0
      %1170 = vmatpush1.msra.mxu0 %v1133
      %1171 = vmatprep.subr.mxu0 0.0
      %1172 = vmatpush1.msra.mxu0 %v1134
      %1173 = vmatprep.subr.mxu0 0.0
      %1174 = vmatpush1.msra.mxu0 %v1135
      %1175 = vmatprep.subr.mxu0 0.0
      %1176 = vmatpush1.msra.mxu0 0.0
      %1177 = vmatprep.subr.mxu0 0.0
      %1178 = vmatpush1.msra.mxu0 0.0
      %1179 = vmatprep.subr.mxu0 0.0
      %1180 = vmatpush1.msra.mxu0 0.0
      %1181 = vmatprep.subr.mxu0 0.0
      %1182 = vmatpush1.msra.mxu0 0.0
      %1183 = vmatprep.subr.mxu0 0.0
      %1184 = vmatpush1.msra.mxu0 0.0
      %1185 = vmatprep.subr.mxu0 0.0
      %1186 = vmatpush1.msra.mxu0 0.0
      %1187 = vmatprep.subr.mxu0 0.0
      %1188 = vmatpush1.msra.mxu0 0.0
      %1189 = vmatprep.subr.mxu0 0.0
      %1190 = vmatpush1.msra.mxu0 0.0
      %1191 = vmatprep.subr.mxu0 0.0
      %1192 = vmatpush1.msra.mxu0 0.0
      %1193 = vmatprep.subr.mxu0 0.0
      %1194 = vmatpush1.msra.mxu0 0.0
      %1195 = vmatprep.subr.mxu0 0.0
      %1196 = vmatpush1.msra.mxu0 0.0
      %1197 = vmatprep.subr.mxu0 0.0
      %1198 = vmatpush1.msra.mxu0 0.0
      %1199 = vmatprep.subr.mxu0 0.0
      %1200 = vmatpush1.msra.mxu0 0.0
      %1201 = vmatprep.subr.mxu0 0.0
      %1202 = vmatpush1.msra.mxu0 0.0
      %1203 = vmatprep.subr.mxu0 0.0
      %1204 = vmatpush1.msra.mxu0 0.0
      %1205 = vmatprep.subr.mxu0 0.0
      %1206 = vmatpush1.msra.mxu0 0.0
      %1207 = vmatprep.mubr.f32.mxu0 0.0
      %1208 = vmatmul.mubr.f32.gmra.mrb[0].mxu0 %v1072
      %v1209 = vpop.f32.mrb[0].mxu0
      %v1210 = vadd.f32 %v1141, %v1209
      %v1211 = vpop.f32.mrb[0].mxu0
      %1212 = vmatprep.mubr.f32.mxu0 0.0
      %1213 = vmatmul.mubr.f32.gmra.mrb[0].mxu0 %v1073
      %v1214 = vpop.f32.mrb[0].mxu0
      %v1215 = vadd.f32 %v1141, %v1214
      %v1216 = vpop.f32.mrb[0].mxu0
      %1217 = vmatprep.mubr.f32.mxu0 0.0
      %1218 = vmatmul.mubr.f32.gmra.mrb[0].mxu0 %v1074
      %v1219 = vpop.f32.mrb[0].mxu0
      %v1220 = vadd.f32 %v1141, %v1219
      %v1221 = vpop.f32.mrb[0].mxu0
      %1222 = vmatprep.mubr.f32.mxu0 0.0
      %1223 = vmatmul.mubr.f32.gmra.mrb[0].mxu0 %v1075
      %v1224 = vpop.f32.mrb[0].mxu0
      %v1225 = vadd.f32 %v1141, %v1224
      %v1226 = vpop.f32.mrb[0].mxu0
      %1227 = vmatprep.mubr.f32.mxu0 0.0
      %1228 = vmatmul.mubr.f32.gmra.mrb[0].mxu0 %v1076
      %v1229 = vpop.f32.mrb[0].mxu0
      %v1230 = vadd.f32 %v1141, %v1229
      %v1231 = vpop.f32.mrb[0].mxu0
      %1232 = vmatprep.mubr.f32.mxu0 0.0
      %1233 = vmatmul.mubr.f32.gmra.mrb[0].mxu0 %v1077
      %v1234 = vpop.f32.mrb[0].mxu0
      %v1235 = vadd.f32 %v1141, %v1234
      %v1236 = vpop.f32.mrb[0].mxu0
      %1237 = vmatprep.mubr.f32.mxu0 0.0
      %1238 = vmatmul.mubr.f32.gmra.mrb[0].mxu0 %v1078
      %v1239 = vpop.f32.mrb[0].mxu0
      %v1240 = vadd.f32 %v1141, %v1239
      %v1241 = vpop.f32.mrb[0].mxu0
      %1242 = vmatprep.mubr.f32.mxu0 0.0
      %1243 = vmatmul.mubr.f32.gmra.mrb[0].mxu0 %v1079
      %v1244 = vpop.f32.mrb[0].mxu0
      %v1245 = vadd.f32 %v1141, %v1244
      %v1246 = vpop.f32.mrb[0].mxu0
      %1247 = vmatprep.mubr.f32.mxu0 0.0
      %1248 = vmatmul.mubr.f32.gmra.mrb[0].mxu0 %v1080
      %v1249 = vpop.f32.mrb[0].mxu0
      %v1250 = vadd.f32 %v1141, %v1249
      %v1251 = vpop.f32.mrb[0].mxu0
      %1252 = vmatprep.mubr.f32.mxu0 0.0
      %1253 = vmatmul.mubr.f32.gmra.mrb[0].mxu0 %v1081
      %v1254 = vpop.f32.mrb[0].mxu0
      %v1255 = vadd.f32 %v1141, %v1254
      %v1256 = vpop.f32.mrb[0].mxu0
      %1257 = vmatprep.mubr.f32.mxu0 0.0
      %1258 = vmatmul.mubr.f32.gmra.mrb[0].mxu0 %v1082
      %v1259 = vpop.f32.mrb[0].mxu0
      %v1260 = vadd.f32 %v1141, %v1259
      %v1261 = vpop.f32.mrb[0].mxu0
      %1262 = vmatprep.mubr.f32.mxu0 0.0
      %1263 = vmatmul.mubr.f32.gmra.mrb[0].mxu0 %v1083
      %v1264 = vpop.f32.mrb[0].mxu0
      %v1265 = vadd.f32 %v1141, %v1264
      %v1266 = vpop.f32.mrb[0].mxu0
      %1267 = vmatprep.mubr.f32.mxu0 0.0
      %1268 = vmatmul.mubr.f32.gmra.mrb[0].mxu0 %v1084
      %v1269 = vpop.f32.mrb[0].mxu0
      %v1270 = vadd.f32 %v1141, %v1269
      %v1271 = vpop.f32.mrb[0].mxu0
      %1272 = vmatprep.mubr.f32.mxu0 0.0
      %1273 = vmatmul.mubr.f32.gmra.mrb[0].mxu0 %v1085
      %v1274 = vpop.f32.mrb[0].mxu0
      %v1275 = vadd.f32 %v1141, %v1274
      %v1276 = vpop.f32.mrb[0].mxu0
      %1277 = vmatprep.mubr.f32.mxu0 0.0
      %1278 = vmatmul.mubr.f32.gmra.mrb[0].mxu0 %v1086
      %v1279 = vpop.f32.mrb[0].mxu0
      %v1280 = vadd.f32 %v1141, %v1279
      %v1281 = vpop.f32.mrb[0].mxu0
      %1282 = vmatprep.mubr.f32.mxu0 0.0
      %1283 = vmatmul.mubr.f32.gmra.mrb[0].mxu0 %v1087
      %v1284 = vpop.f32.mrb[0].mxu0
      %v1285 = vadd.f32 %v1141, %v1284
      %v1286 = vpop.f32.mrb[0].mxu0
      %1287 = vmatprep.mubr.f32.mxu0 0.0
      %1288 = vmatmul.mubr.f32.gmra.mrb[0].mxu0 %v1088
      %v1289 = vpop.f32.mrb[0].mxu0
      %v1290 = vadd.f32 %v1141, %v1289
      %v1291 = vpop.f32.mrb[0].mxu0
      %1292 = vmatprep.mubr.f32.mxu0 0.0
      %1293 = vmatmul.mubr.f32.gmra.mrb[0].mxu0 %v1089
      %v1294 = vpop.f32.mrb[0].mxu0
      %v1295 = vadd.f32 %v1141, %v1294
      %v1296 = vpop.f32.mrb[0].mxu0
      %1297 = vmatprep.mubr.f32.mxu0 0.0
      %1298 = vmatmul.mubr.f32.gmra.mrb[0].mxu0 %v1090
      %v1299 = vpop.f32.mrb[0].mxu0
      %v1300 = vadd.f32 %v1141, %v1299
      %v1301 = vpop.f32.mrb[0].mxu0
      %1302 = vmatprep.mubr.f32.mxu0 0.0
      %1303 = vmatmul.mubr.f32.gmra.mrb[0].mxu0 %v1091
      %v1304 = vpop.f32.mrb[0].mxu0
      %v1305 = vadd.f32 %v1141, %v1304
      %v1306 = vpop.f32.mrb[0].mxu0
      %1307 = vmatprep.mubr.f32.mxu0 0.0
      %1308 = vmatmul.mubr.f32.gmra.mrb[0].mxu0 %v1092
      %v1309 = vpop.f32.mrb[0].mxu0
      %v1310 = vadd.f32 %v1141, %v1309
      %v1311 = vpop.f32.mrb[0].mxu0
      %1312 = vmatprep.mubr.f32.mxu0 0.0
      %1313 = vmatmul.mubr.f32.gmra.mrb[0].mxu0 %v1093
      %v1314 = vpop.f32.mrb[0].mxu0
      %v1315 = vadd.f32 %v1141, %v1314
      %v1316 = vpop.f32.mrb[0].mxu0
      %1317 = vmatprep.mubr.f32.mxu0 0.0
      %1318 = vmatmul.mubr.f32.gmra.mrb[0].mxu0 %v1094
      %v1319 = vpop.f32.mrb[0].mxu0
      %v1320 = vadd.f32 %v1141, %v1319
      %v1321 = vpop.f32.mrb[0].mxu0
      %1322 = vmatprep.mubr.f32.mxu0 0.0
      %1323 = vmatmul.mubr.f32.gmra.mrb[0].mxu0 %v1095
      %v1324 = vpop.f32.mrb[0].mxu0
      %v1325 = vadd.f32 %v1141, %v1324
      %v1326 = vpop.f32.mrb[0].mxu0
      %1327 = vmatprep.mubr.f32.mxu0 0.0
      %1328 = vmatmul.mubr.f32.gmra.mrb[0].mxu0 %v1096
      %v1329 = vpop.f32.mrb[0].mxu0
      %v1330 = vadd.f32 %v1141, %v1329
      %v1331 = vpop.f32.mrb[0].mxu0
      %1332 = vmatprep.mubr.f32.mxu0 0.0
      %1333 = vmatmul.mubr.f32.gmra.mrb[0].mxu0 %v1097
      %v1334 = vpop.f32.mrb[0].mxu0
      %v1335 = vadd.f32 %v1141, %v1334
      %v1336 = vpop.f32.mrb[0].mxu0
      %1337 = vmatprep.mubr.f32.mxu0 0.0
      %1338 = vmatmul.mubr.f32.gmra.mrb[0].mxu0 %v1098
      %v1339 = vpop.f32.mrb[0].mxu0
      %v1340 = vadd.f32 %v1141, %v1339
      %v1341 = vpop.f32.mrb[0].mxu0
      %1342 = vmatprep.mubr.f32.mxu0 0.0
      %1343 = vmatmul.mubr.f32.gmra.mrb[0].mxu0 %v1099
      %v1344 = vpop.f32.mrb[0].mxu0
      %v1345 = vadd.f32 %v1141, %v1344
      %v1346 = vpop.f32.mrb[0].mxu0
      %1347 = vmatprep.mubr.f32.mxu0 0.0
      %1348 = vmatmul.mubr.f32.gmra.mrb[0].mxu0 %v1100
      %v1349 = vpop.f32.mrb[0].mxu0
      %v1350 = vadd.f32 %v1141, %v1349
      %v1351 = vpop.f32.mrb[0].mxu0
      %1352 = vmatprep.mubr.f32.mxu0 0.0
      %1353 = vmatmul.mubr.f32.gmra.mrb[0].mxu0 %v1101
      %v1354 = vpop.f32.mrb[0].mxu0
      %v1355 = vadd.f32 %v1141, %v1354
      %v1356 = vpop.f32.mrb[0].mxu0
      %1357 = vmatprep.mubr.f32.mxu0 0.0
      %1358 = vmatmul.mubr.f32.gmra.mrb[0].mxu0 %v1102
      %v1359 = vpop.f32.mrb[0].mxu0
      %v1360 = vadd.f32 %v1141, %v1359
      %v1361 = vpop.f32.mrb[0].mxu0
      %1362 = vmatprep.mubr.f32.mxu0 0.0
      %1363 = vmatmul.mubr.f32.gmra.mrb[0].mxu0 %v1103
      %v1364 = vpop.f32.mrb[0].mxu0
      %v1365 = vadd.f32 %v1141, %v1364
      %v1366 = vpop.f32.mrb[0].mxu0
      %1367 = vmatprep.mubr.f32.mxu0 0.0
      %1368 = vmatmul.mubr.f32.gmra.mrb[0].mxu0 %v1104
      %v1369 = vpop.f32.mrb[0].mxu0
      %v1370 = vadd.f32 %v1141, %v1369
      %v1371 = vpop.f32.mrb[0].mxu0
      %1372 = vmatprep.mubr.f32.mxu0 0.0
      %1373 = vmatmul.mubr.f32.gmra.mrb[0].mxu0 %v1105
      %v1374 = vpop.f32.mrb[0].mxu0
      %v1375 = vadd.f32 %v1141, %v1374
      %v1376 = vpop.f32.mrb[0].mxu0
      %1377 = vmatprep.mubr.f32.mxu0 0.0
      %1378 = vmatmul.mubr.f32.gmra.mrb[0].mxu0 %v1106
      %v1379 = vpop.f32.mrb[0].mxu0
      %v1380 = vadd.f32 %v1141, %v1379
      %v1381 = vpop.f32.mrb[0].mxu0
      %1382 = vmatprep.mubr.f32.mxu0 0.0
      %1383 = vmatmul.mubr.f32.gmra.mrb[0].mxu0 %v1107
      %v1384 = vpop.f32.mrb[0].mxu0
      %v1385 = vadd.f32 %v1141, %v1384
      %v1386 = vpop.f32.mrb[0].mxu0
      %1387 = vmatprep.mubr.f32.mxu0 0.0
      %1388 = vmatmul.mubr.f32.gmra.mrb[0].mxu0 %v1108
      %v1389 = vpop.f32.mrb[0].mxu0
      %v1390 = vadd.f32 %v1141, %v1389
      %v1391 = vpop.f32.mrb[0].mxu0
      %1392 = vmatprep.mubr.f32.mxu0 0.0
      %1393 = vmatmul.mubr.f32.gmra.mrb[0].mxu0 %v1109
      %v1394 = vpop.f32.mrb[0].mxu0
      %v1395 = vadd.f32 %v1141, %v1394
      %v1396 = vpop.f32.mrb[0].mxu0
      %1397 = vmatprep.mubr.f32.mxu0 0.0
      %1398 = vmatmul.mubr.f32.gmra.mrb[0].mxu0 %v1110
      %v1399 = vpop.f32.mrb[0].mxu0
      %v1400 = vadd.f32 %v1141, %v1399
      %v1401 = vpop.f32.mrb[0].mxu0
      %1402 = vmatprep.mubr.f32.mxu0 0.0
      %1403 = vmatmul.mubr.f32.gmra.mrb[0].mxu0 %v1111
      %v1404 = vpop.f32.mrb[0].mxu0
      %v1405 = vadd.f32 %v1141, %v1404
      %v1406 = vpop.f32.mrb[0].mxu0
      %1407 = vmatprep.mubr.f32.mxu0 0.0
      %1408 = vmatmul.mubr.f32.gmra.mrb[0].mxu0 %v1112
      %v1409 = vpop.f32.mrb[0].mxu0
      %v1410 = vadd.f32 %v1141, %v1409
      %v1411 = vpop.f32.mrb[0].mxu0
      %1412 = vmatprep.mubr.f32.mxu0 0.0
      %1413 = vmatmul.mubr.f32.gmra.mrb[0].mxu0 %v1113
      %v1414 = vpop.f32.mrb[0].mxu0
      %v1415 = vadd.f32 %v1141, %v1414
      %v1416 = vpop.f32.mrb[0].mxu0
      %1417 = vmatprep.mubr.f32.mxu0 0.0
      %1418 = vmatmul.mubr.f32.gmra.mrb[0].mxu0 %v1114
      %v1419 = vpop.f32.mrb[0].mxu0
      %v1420 = vadd.f32 %v1141, %v1419
      %v1421 = vpop.f32.mrb[0].mxu0
      %1422 = vmatprep.mubr.f32.mxu0 0.0
      %1423 = vmatmul.mubr.f32.gmra.mrb[0].mxu0 %v1115
      %v1424 = vpop.f32.mrb[0].mxu0
      %v1425 = vadd.f32 %v1141, %v1424
      %v1426 = vpop.f32.mrb[0].mxu0
      %1427 = vmatprep.mubr.f32.mxu0 0.0
      %1428 = vmatmul.mubr.f32.gmra.mrb[0].mxu0 %v1116
      %v1429 = vpop.f32.mrb[0].mxu0
      %v1430 = vadd.f32 %v1141, %v1429
      %v1431 = vpop.f32.mrb[0].mxu0
      %1432 = vmatprep.mubr.f32.mxu0 0.0
      %1433 = vmatmul.mubr.f32.gmra.mrb[0].mxu0 %v1117
      %v1434 = vpop.f32.mrb[0].mxu0
      %v1435 = vadd.f32 %v1141, %v1434
      %v1436 = vpop.f32.mrb[0].mxu0
      %1437 = vmatprep.mubr.f32.mxu0 0.0
      %1438 = vmatmul.mubr.f32.gmra.mrb[0].mxu0 %v1118
      %v1439 = vpop.f32.mrb[0].mxu0
      %v1440 = vadd.f32 %v1141, %v1439
      %v1441 = vpop.f32.mrb[0].mxu0
      %1442 = vmatprep.mubr.f32.mxu0 0.0
      %1443 = vmatmul.mubr.f32.gmra.mrb[0].mxu0 %v1119
      %v1444 = vpop.f32.mrb[0].mxu0
      %v1445 = vadd.f32 %v1141, %v1444
      %v1446 = vpop.f32.mrb[0].mxu0
      %1447 = vdwg.mxu0
      %v1448 = vmax.f32 %v1210, 0.0
      %v1449 = vmax.f32 %v1215, 0.0
      %v1450 = vmax.f32 %v1220, 0.0
      %v1451 = vmax.f32 %v1225, 0.0
      %v1452 = vmax.f32 %v1230, 0.0
      %v1453 = vmax.f32 %v1235, 0.0
      %v1454 = vmax.f32 %v1240, 0.0
      %v1455 = vmax.f32 %v1245, 0.0
      %v1456 = vmax.f32 %v1250, 0.0
      %v1457 = vmax.f32 %v1255, 0.0
      %v1458 = vmax.f32 %v1260, 0.0
      %v1459 = vmax.f32 %v1265, 0.0
      %v1460 = vmax.f32 %v1270, 0.0
      %v1461 = vmax.f32 %v1275, 0.0
      %v1462 = vmax.f32 %v1280, 0.0
      %v1463 = vmax.f32 %v1285, 0.0
      %v1464 = vmax.f32 %v1290, 0.0
      %v1465 = vmax.f32 %v1295, 0.0
      %v1466 = vmax.f32 %v1300, 0.0
      %v1467 = vmax.f32 %v1305, 0.0
      %v1468 = vmax.f32 %v1310, 0.0
      %v1469 = vmax.f32 %v1315, 0.0
      %v1470 = vmax.f32 %v1320, 0.0
      %v1471 = vmax.f32 %v1325, 0.0
      %v1472 = vmax.f32 %v1330, 0.0
      %v1473 = vmax.f32 %v1335, 0.0
      %v1474 = vmax.f32 %v1340, 0.0
      %v1475 = vmax.f32 %v1345, 0.0
      %v1476 = vmax.f32 %v1350, 0.0
      %v1477 = vmax.f32 %v1355, 0.0
      %v1478 = vmax.f32 %v1360, 0.0
      %v1479 = vmax.f32 %v1365, 0.0
      %v1480 = vmax.f32 %v1370, 0.0
      %v1481 = vmax.f32 %v1375, 0.0
      %v1482 = vmax.f32 %v1380, 0.0
      %v1483 = vmax.f32 %v1385, 0.0
      %v1484 = vmax.f32 %v1390, 0.0
      %v1485 = vmax.f32 %v1395, 0.0
      %v1486 = vmax.f32 %v1400, 0.0
      %v1487 = vmax.f32 %v1405, 0.0
      %v1488 = vmax.f32 %v1410, 0.0
      %v1489 = vmax.f32 %v1415, 0.0
      %v1490 = vmax.f32 %v1420, 0.0
      %v1491 = vmax.f32 %v1425, 0.0
      %v1492 = vmax.f32 %v1430, 0.0
      %v1493 = vmax.f32 %v1435, 0.0
      %v1494 = vmax.f32 %v1440, 0.0
      %v1495 = vmax.f32 %v1445, 0.0
      %1496 = vst [vmem:[#allocation11] sm:$0xff] %v1448
      %1497 = vst [vmem:[#allocation11 + $0x8] sm:$0xff] %v1449
      %1498 = vst [vmem:[#allocation11 + $0x10] sm:$0xff] %v1450
      %1499 = vst [vmem:[#allocation11 + $0x18] sm:$0xff] %v1451
      %1500 = vst [vmem:[#allocation11 + $0x20] sm:$0xff] %v1452
      %1501 = vst [vmem:[#allocation11 + $0x28] sm:$0xff] %v1453
      %1502 = vst [vmem:[#allocation11 + $0x30] sm:$0xff] %v1454
      %1503 = vst [vmem:[#allocation11 + $0x38] sm:$0xff] %v1455
      %1504 = vst [vmem:[#allocation11 + $0x40] sm:$0xff] %v1456
      %1505 = vst [vmem:[#allocation11 + $0x48] sm:$0xff] %v1457
      %1506 = vst [vmem:[#allocation11 + $0x50] sm:$0xff] %v1458
      %1507 = vst [vmem:[#allocation11 + $0x58] sm:$0xff] %v1459
      %1508 = vst [vmem:[#allocation11 + $0x60] sm:$0xff] %v1460
      %1509 = vst [vmem:[#allocation11 + $0x68] sm:$0xff] %v1461
      %1510 = vst [vmem:[#allocation11 + $0x70] sm:$0xff] %v1462
      %1511 = vst [vmem:[#allocation11 + $0x78] sm:$0xff] %v1463
      %1512 = vst [vmem:[#allocation11 + $0x80] sm:$0xff] %v1464
      %1513 = vst [vmem:[#allocation11 + $0x88] sm:$0xff] %v1465
      %1514 = vst [vmem:[#allocation11 + $0x90] sm:$0xff] %v1466
      %1515 = vst [vmem:[#allocation11 + $0x98] sm:$0xff] %v1467
      %1516 = vst [vmem:[#allocation11 + $0xa0] sm:$0xff] %v1468
      %1517 = vst [vmem:[#allocation11 + $0xa8] sm:$0xff] %v1469
      %1518 = vst [vmem:[#allocation11 + $0xb0] sm:$0xff] %v1470
      %1519 = vst [vmem:[#allocation11 + $0xb8] sm:$0xff] %v1471
      %1520 = vst [vmem:[#allocation11 + $0xc0] sm:$0xff] %v1472
      %1521 = vst [vmem:[#allocation11 + $0xc8] sm:$0xff] %v1473
      %1522 = vst [vmem:[#allocation11 + $0xd0] sm:$0xff] %v1474
      %1523 = vst [vmem:[#allocation11 + $0xd8] sm:$0xff] %v1475
      %1524 = vst [vmem:[#allocation11 + $0xe0] sm:$0xff] %v1476
      %1525 = vst [vmem:[#allocation11 + $0xe8] sm:$0xff] %v1477
      %1526 = vst [vmem:[#allocation11 + $0xf0] sm:$0xff] %v1478
      %1527 = vst [vmem:[#allocation11 + $0xf8] sm:$0xff] %v1479
      %1528 = vst [vmem:[#allocation11 + $0x100] sm:$0xff] %v1480
      %1529 = vst [vmem:[#allocation11 + $0x108] sm:$0xff] %v1481
      %1530 = vst [vmem:[#allocation11 + $0x110] sm:$0xff] %v1482
      %1531 = vst [vmem:[#allocation11 + $0x118] sm:$0xff] %v1483
      %1532 = vst [vmem:[#allocation11 + $0x120] sm:$0xff] %v1484
      %1533 = vst [vmem:[#allocation11 + $0x128] sm:$0xff] %v1485
      %1534 = vst [vmem:[#allocation11 + $0x130] sm:$0xff] %v1486
      %1535 = vst [vmem:[#allocation11 + $0x138] sm:$0xff] %v1487
      %1536 = vst [vmem:[#allocation11 + $0x140] sm:$0xff] %v1488
      %1537 = vst [vmem:[#allocation11 + $0x148] sm:$0xff] %v1489
      %1538 = vst [vmem:[#allocation11 + $0x150] sm:$0xff] %v1490
      %1539 = vst [vmem:[#allocation11 + $0x158] sm:$0xff] %v1491
      %1540 = vst [vmem:[#allocation11 + $0x160] sm:$0xff] %v1492
      %1541 = vst [vmem:[#allocation11 + $0x168] sm:$0xff] %v1493
      %1542 = vst [vmem:[#allocation11 + $0x170] sm:$0xff] %v1494
      %1543 = vst [vmem:[#allocation11 + $0x178] sm:$0xff] %v1495
    $region41: #{tpu_custom_call.1} parent=1 // pred_fallthru
      _
    // Predicated region
    $region42: #{tpu_custom_call.1} parent=1 // pred_check
      _
    $region43: #{tpu_custom_call.1} parent=1 // pred_check_branch
      %1545 = sbr.rel (0) target = $region45
    $region44: #{tpu_custom_call.1} parent=1 // pred_region
      %s1547 = ssub.s32 6144, 6144
      %1548 = vsyncadd [#allocation5], %s1547
      %s1549 = sshll.u32 [#allocation11], 4
      %s1550 = int_to_ptr.vmem [resolvable:$true] %s1549
      %1555 = dma.vmem_to_hbm [thread:$0]  %s1550, 6144, %s4, [#allocation5], 128, 128, 8
    $region45: #{tpu_custom_call.1} parent=1 // pred_fallthru
      _
    // Predicated region
    $region46: #{tpu_custom_call.1} parent=1 // pred_check
      _
    $region47: #{tpu_custom_call.1} parent=1 // pred_check_branch
      %1557 = sbr.rel (0) target = $region49
    $region48: #{tpu_custom_call.1} parent=1 // pred_region
      %1558 = dma.done [#allocation5], 6144
    $region49: #{tpu_custom_call.1} parent=1 // pred_fallthru
      _
    %1559 = vsyncpa [#allocation4], 1
    %1560 = vsyncpa [#allocation7], 1
    %1561 = vsyncpa [#allocation10], 1
    %1562 = vsyncpa [#allocation5], 1

</llo_original>
